<compile_context>
chip_gen: v6e
topology: v6e:2x2x1
jax: 0.10.0
libtpu: 0.0.40
codegen_flags: <defaults>
</compile_context>

<pallas_src>
import functools
import math

import jax
import jax.numpy as jnp
from jax import lax
from jax.experimental import pallas as pl
from jax.experimental.pallas import tpu as pltpu

BN_EPS = 1e-5   # PyTorch nn.BatchNorm2d default
KS = 5          # GhostConv "cheap operation" depthwise kernel size


def _silu(x):
    return x * jax.nn.sigmoid(x)


# ------------------------------ fused Pallas kernel ---------------------------

def _ghost_bottleneck_kernel(H, W,
                             x_ref, mask_ref,
                             w1p_ref, b1p_ref, w1d_ref, b1d_ref,
                             w2p_ref, b2p_ref, w2d_ref, b2d_ref,
                             o_ref):
    """One batch element. Layout: channels on sublanes, H*W flattened on lanes.

      GhostConv1:  y1a = SiLU(PW(x)),  y1b = SiLU(DW5(y1a)),  y1 = [y1a; y1b]
      GhostConv2:  y2a = PW(y1),       y2b = DW5(y2a)
      out = [y2a; y2b] + x            (identity shortcut, requires c1 == c2)
    """
    HW = H * W
    x = x_ref[...].astype(jnp.float32)                      # (C1, HW)

    def pw_conv(parts, w, b, act):
        # 1x1 conv as VPU broadcast-MACs (tiny channel counts -> skip the MXU).
        cout = w.shape[0]
        acc = jnp.zeros((cout, HW), jnp.float32) + b        # bias-only epilogue
        k = 0
        for part in parts:                                   # channel-concat handled
            for r in range(part.shape[0]):                   # implicitly here
                acc = acc + w[:, k:k + 1] * part[r:r + 1, :]
                k += 1
        return _silu(acc) if act else acc

    def dw_conv(inp, w, b, act):
        # Depthwise 5x5, stride 1, SAME. Spatial shifts are lane rolls (XLU slot);
        # zero-padding halo is applied via precomputed 0/1 boundary masks, so no
        # jnp.pad / extra HBM traffic is needed.
        c = inp.shape[0]
        acc = jnp.zeros((c, HW), jnp.float32) + b
        r = KS // 2
        t = 0
        for di in range(-r, r + 1):
            for dj in range(-r, r + 1):
                off = di * W + dj
                shifted = inp if off == 0 else pltpu.roll(inp, shift=(-off) % HW, axis=1)
                m = mask_ref[t:t + 1, :]                     # (1, HW) 0/1
                acc = acc + (shifted * m) * w[:, t:t + 1]
                t += 1
        return _silu(acc) if act else acc

    # --- GhostConv(c1 -> c_), SiLU --------------------------------------------
    y1a = pw_conv([x], w1p_ref[...], b1p_ref[...], act=True)
    y1b = dw_conv(y1a, w1d_ref[...], b1d_ref[...], act=True)

    # --- GhostConv(c_ -> c2), no act ------------------------------------------
    y2a = pw_conv([y1a, y1b], w2p_ref[...], b2p_ref[...], act=False)
    y2b = dw_conv(y2a, w2d_ref[...], b2d_ref[...], act=False)

    # --- concat + identity shortcut written straight into the two channel halves
    #     of the lane-dense output block (fused residual, no concat copy) -------
    c2h = y2a.shape[0]
    o_ref[0:c2h, :] = (y2a + x[0:c2h, :]).astype(o_ref.dtype)
    o_ref[c2h:2 * c2h, :] = (y2b + x[c2h:2 * c2h, :]).astype(o_ref.dtype)


# --------------------------------- wrapper ------------------------------------

def _fold_pw(w, scale):
    # (Cin, Cout) 1x1 conv weight, BN scale folded in -> (Cout, Cin)
    return (w * scale[None, :]).T


def _fold_dw(w, scale):
    # (KS, KS, C) depthwise weight, BN scale folded in -> (C, KS*KS)
    return (w * scale[None, None, :]).reshape(KS * KS, -1).T


def _boundary_masks(H, W, dtype):
    # (KS*KS, H*W) 0/1 masks: is the 5x5 tap's source pixel inside the image?
    # Replaces jnp.pad; depends only on static H, W -> constant-folded by XLA.
    i = jnp.arange(H * W) // W
    j = jnp.arange(H * W) % W
    r = KS // 2
    rows = []
    for di in range(-r, r + 1):
        for dj in range(-r, r + 1):
            rows.append((i + di >= 0) & (i + di < H) & (j + dj >= 0) & (j + dj < W))
    return jnp.stack(rows, 0).astype(dtype)


@jax.jit
def ghost_bottleneck_forward(x_nchw, params):
    """GhostBottleneck forward, default k=3, s=1 (middle DWConv & shortcut = Identity)."""
    # TODO(synk): stride-2 branch (middle DWConv s=2 + DWConv/Conv shortcut) not implemented;
    #             module-default s=1 path only (identity shortcut requires c1 == c2).
    N, C1, H, W = x_nchw.shape
    HW = H * W
    g1, g2 = params["g1"], params["g2"]
    c1h = g1["pw_w"].shape[1]                 # GhostConv1 half width
    c2h = g2["pw_w"].shape[1]                 # GhostConv2 half width
    C2 = 2 * c2h
    assert C1 == C2, "s=1 identity shortcut requires c1 == c2"
    assert 2 * c1h == g2["pw_w"].shape[0]

    # Fold BN scale into conv weights (kernel epilogues become bias-only).
    w1p = _fold_pw(g1["pw_w"], g1["pw_scale"]); b1p = g1["pw_bias"].reshape(c1h, 1)
    w1d = _fold_dw(g1["dw_w"], g1["dw_scale"]); b1d = g1["dw_bias"].reshape(c1h, 1)
    w2p = _fold_pw(g2["pw_w"], g2["pw_scale"]); b2p = g2["pw_bias"].reshape(c2h, 1)
    w2d = _fold_dw(g2["dw_w"], g2["dw_scale"]); b2d = g2["dw_bias"].reshape(c2h, 1)

    masks = _boundary_masks(H, W, x_nchw.dtype)

    x_flat = x_nchw.reshape(N, C1, HW)        # NCHW, H*W flattened -> lane-dense blocks
    rep = lambda n: (0, 0)                    # weights / masks: same block every step

    out = pl.pallas_call(
        functools.partial(_ghost_bottleneck_kernel, H, W),
        out_shape=jax.ShapeDtypeStruct((N, C2, HW), x_nchw.dtype),
        grid=(N,),
        in_specs=[
            pl.BlockSpec((None, C1, HW), lambda n: (n, 0, 0)),
            pl.BlockSpec(masks.shape, rep),
            pl.BlockSpec(w1p.shape, rep), pl.BlockSpec(b1p.shape, rep),
            pl.BlockSpec(w1d.shape, rep), pl.BlockSpec(b1d.shape, rep),
            pl.BlockSpec(w2p.shape, rep), pl.BlockSpec(b2p.shape, rep),
            pl.BlockSpec(w2d.shape, rep), pl.BlockSpec(b2d.shape, rep),
        ],
        out_specs=pl.BlockSpec((None, C2, HW), lambda n: (n, 0, 0)),
        compiler_params=pltpu.CompilerParams(
            dimension_semantics=("parallel",)),   # v7x: shard batch across both TCs
    )(x_flat, masks, w1p, b1p, w1d, b1d, w2p, b2p, w2d, b2d)

    return out.reshape(N, C2, H, W)


# ---------------------------- deterministic params -----------------------------

def _bn_fold(key, c):
    k1, k2, k3, k4 = jax.random.split(key, 4)
    gamma = jax.random.uniform(k1, (c,), jnp.float32, 0.5, 1.5)
    beta = 0.1 * jax.random.normal(k2, (c,), jnp.float32)
    mean = 0.1 * jax.random.normal(k3, (c,), jnp.float32)
    var = jax.random.uniform(k4, (c,), jnp.float32, 0.5, 1.5)
    scale = gamma / jnp.sqrt(var + BN_EPS)
    bias = beta - mean * scale
    return scale, bias


def _ghost_conv_params(key, c1, c2):
    c_ = c2 // 2
    k1, k2, k3, k4 = jax.random.split(key, 4)
    pw_w = jax.random.normal(k1, (c1, c_), jnp.float32) / math.sqrt(c1)   # (Cin, Cout)
    pw_scale, pw_bias = _bn_fold(k2, c_)
    dw_w = jax.random.normal(k3, (KS, KS, c_), jnp.float32) / KS          # (kh, kw, C)
    dw_scale, dw_bias = _bn_fold(k4, c_)
    return dict(pw_w=pw_w, pw_scale=pw_scale, pw_bias=pw_bias,
                dw_w=dw_w, dw_scale=dw_scale, dw_bias=dw_bias)


def make_params(key, c1, c2):
    c_ = c2 // 2
    k1, k2 = jax.random.split(key)
    return {"g1": _ghost_conv_params(k1, c1, c_),
            "g2": _ghost_conv_params(k2, c_, c2)}


# ------------------------------ pure-JAX reference -----------------------------

def _pw_ref(x, w, s, b, act):
    y = jnp.einsum("nhwc,cd->nhwd", x, w) * s + b
    return _silu(y) if act else y


def _dw_ref(x, w, s, b, act):
    C = x.shape[-1]
    y = lax.conv_general_dilated(x, w.reshape(KS, KS, 1, C), (1, 1), "SAME",
                                 dimension_numbers=("NHWC", "HWIO", "NHWC"),
                                 feature_group_count=C)
    y = y * s + b
    return _silu(y) if act else y


def _ghost_conv_ref(x, p, act):
    y1 = _pw_ref(x, p["pw_w"], p["pw_scale"], p["pw_bias"], act)
    y2 = _dw_ref(y1, p["dw_w"], p["dw_scale"], p["dw_bias"], act)
    return jnp.concatenate([y1, y2], axis=-1)


def ghost_bottleneck_ref(x_nchw, params):
    x = jnp.transpose(x_nchw, (0, 2, 3, 1))
    y = _ghost_conv_ref(x, params["g1"], True)
    z = _ghost_conv_ref(y, params["g2"], False)
    return jnp.transpose(z + x, (0, 3, 1, 2))


# ----------------------------------- main ---------------------------------------

if __name__ == "__main__":
    C1 = C2 = 8                 # s=1 residual path requires c1 == c2; c2 % 4 == 0
    N, H, W = 2, 16, 16

    key = jax.random.PRNGKey(0)
    kx, kp = jax.random.split(key)
    x = jax.random.normal(kx, (N, C1, H, W), jnp.float32)   # NCHW like PyTorch
    params = make_params(kp, C1, C2)

    out = jax.block_until_ready(ghost_bottleneck_forward(x, params))
    ref = jax.block_until_ready(ghost_bottleneck_ref(x, params))

    assert out.shape == (N, C2, H, W), out.shape
    err = float(jnp.abs(out - ref).max())
    assert jnp.allclose(out, ref, atol=1e-4, rtol=1e-4), err
    print("KERNEL_OK")
</pallas_src>

<mosaic_0001>
module attributes {stable_mosaic.version = 11 : i64} {
  func.func @_ghost_bottleneck_kernel(%arg0: i32, %arg1: memref<1x8x256xf32, #tpu.memory_space<vmem>>, %arg2: memref<25x256xf32, #tpu.memory_space<vmem>>, %arg3: memref<2x8xf32, #tpu.memory_space<vmem>>, %arg4: memref<2x1xf32, #tpu.memory_space<vmem>>, %arg5: memref<2x25xf32, #tpu.memory_space<vmem>>, %arg6: memref<2x1xf32, #tpu.memory_space<vmem>>, %arg7: memref<4x4xf32, #tpu.memory_space<vmem>>, %arg8: memref<4x1xf32, #tpu.memory_space<vmem>>, %arg9: memref<4x25xf32, #tpu.memory_space<vmem>>, %arg10: memref<4x1xf32, #tpu.memory_space<vmem>>, %arg11: memref<1x8x256xf32, #tpu.memory_space<vmem>>) attributes {dimension_semantics = [#tpu.dimension_semantics<parallel>], iteration_bounds = array<i64: 2>, scalar_prefetch = 0 : i64, scratch_operands = 0 : i64, tpu.core_type = #tpu.core_type<tc>, window_params = [{transform_indices = @transform_0, window_bounds = array<i64: 1, 8, 256>}, {pipeline_mode = #tpu.pipeline_mode<synchronous>, transform_indices = @transform_1, window_bounds = array<i64: 25, 256>}, {pipeline_mode = #tpu.pipeline_mode<synchronous>, transform_indices = @transform_2, window_bounds = array<i64: 2, 8>}, {pipeline_mode = #tpu.pipeline_mode<synchronous>, transform_indices = @transform_3, window_bounds = array<i64: 2, 1>}, {pipeline_mode = #tpu.pipeline_mode<synchronous>, transform_indices = @transform_4, window_bounds = array<i64: 2, 25>}, {pipeline_mode = #tpu.pipeline_mode<synchronous>, transform_indices = @transform_5, window_bounds = array<i64: 2, 1>}, {pipeline_mode = #tpu.pipeline_mode<synchronous>, transform_indices = @transform_6, window_bounds = array<i64: 4, 4>}, {pipeline_mode = #tpu.pipeline_mode<synchronous>, transform_indices = @transform_7, window_bounds = array<i64: 4, 1>}, {pipeline_mode = #tpu.pipeline_mode<synchronous>, transform_indices = @transform_8, window_bounds = array<i64: 4, 25>}, {pipeline_mode = #tpu.pipeline_mode<synchronous>, transform_indices = @transform_9, window_bounds = array<i64: 4, 1>}, {transform_indices = @transform_10, window_bounds = array<i64: 1, 8, 256>}]} {
    %c0 = arith.constant 0 : index
    %c0_0 = arith.constant 0 : index
    %c0_1 = arith.constant 0 : index
    %0 = vector.load %arg1[%c0, %c0_0, %c0_1] : memref<1x8x256xf32, #tpu.memory_space<vmem>>, vector<1x8x256xf32>
    %1 = vector.shape_cast %0 : vector<1x8x256xf32> to vector<8x256xf32>
    %c0_2 = arith.constant 0 : index
    %c0_3 = arith.constant 0 : index
    %2 = vector.load %arg3[%c0_2, %c0_3] : memref<2x8xf32, #tpu.memory_space<vmem>>, vector<2x8xf32>
    %c0_4 = arith.constant 0 : index
    %c0_5 = arith.constant 0 : index
    %3 = vector.load %arg4[%c0_4, %c0_5] : memref<2x1xf32, #tpu.memory_space<vmem>>, vector<2x1xf32>
    %cst = arith.constant 0.000000e+00 : f32
    %4 = vector.broadcast %cst : f32 to vector<2x256xf32>
    %5 = vector.broadcast %3 : vector<2x1xf32> to vector<2x256xf32>
    %6 = arith.addf %4, %5 : vector<2x256xf32>
    %7 = vector.extract_strided_slice %2 {offsets = [0, 0], sizes = [2, 1], strides = [1, 1]} : vector<2x8xf32> to vector<2x1xf32>
    %8 = vector.extract_strided_slice %1 {offsets = [0, 0], sizes = [1, 256], strides = [1, 1]} : vector<8x256xf32> to vector<1x256xf32>
    %9 = vector.broadcast %7 : vector<2x1xf32> to vector<2x256xf32>
    %10 = vector.broadcast %8 : vector<1x256xf32> to vector<2x256xf32>
    %11 = arith.mulf %9, %10 : vector<2x256xf32>
    %12 = arith.addf %6, %11 : vector<2x256xf32>
    %13 = vector.extract_strided_slice %2 {offsets = [0, 1], sizes = [2, 1], strides = [1, 1]} : vector<2x8xf32> to vector<2x1xf32>
    %14 = vector.extract_strided_slice %1 {offsets = [1, 0], sizes = [1, 256], strides = [1, 1]} : vector<8x256xf32> to vector<1x256xf32>
    %15 = vector.broadcast %13 : vector<2x1xf32> to vector<2x256xf32>
    %16 = vector.broadcast %14 : vector<1x256xf32> to vector<2x256xf32>
    %17 = arith.mulf %15, %16 : vector<2x256xf32>
    %18 = arith.addf %12, %17 : vector<2x256xf32>
    %19 = vector.extract_strided_slice %2 {offsets = [0, 2], sizes = [2, 1], strides = [1, 1]} : vector<2x8xf32> to vector<2x1xf32>
    %20 = vector.extract_strided_slice %1 {offsets = [2, 0], sizes = [1, 256], strides = [1, 1]} : vector<8x256xf32> to vector<1x256xf32>
    %21 = vector.broadcast %19 : vector<2x1xf32> to vector<2x256xf32>
    %22 = vector.broadcast %20 : vector<1x256xf32> to vector<2x256xf32>
    %23 = arith.mulf %21, %22 : vector<2x256xf32>
    %24 = arith.addf %18, %23 : vector<2x256xf32>
    %25 = vector.extract_strided_slice %2 {offsets = [0, 3], sizes = [2, 1], strides = [1, 1]} : vector<2x8xf32> to vector<2x1xf32>
    %26 = vector.extract_strided_slice %1 {offsets = [3, 0], sizes = [1, 256], strides = [1, 1]} : vector<8x256xf32> to vector<1x256xf32>
    %27 = vector.broadcast %25 : vector<2x1xf32> to vector<2x256xf32>
    %28 = vector.broadcast %26 : vector<1x256xf32> to vector<2x256xf32>
    %29 = arith.mulf %27, %28 : vector<2x256xf32>
    %30 = arith.addf %24, %29 : vector<2x256xf32>
    %31 = vector.extract_strided_slice %2 {offsets = [0, 4], sizes = [2, 1], strides = [1, 1]} : vector<2x8xf32> to vector<2x1xf32>
    %32 = vector.extract_strided_slice %1 {offsets = [4, 0], sizes = [1, 256], strides = [1, 1]} : vector<8x256xf32> to vector<1x256xf32>
    %33 = vector.broadcast %31 : vector<2x1xf32> to vector<2x256xf32>
    %34 = vector.broadcast %32 : vector<1x256xf32> to vector<2x256xf32>
    %35 = arith.mulf %33, %34 : vector<2x256xf32>
    %36 = arith.addf %30, %35 : vector<2x256xf32>
    %37 = vector.extract_strided_slice %2 {offsets = [0, 5], sizes = [2, 1], strides = [1, 1]} : vector<2x8xf32> to vector<2x1xf32>
    %38 = vector.extract_strided_slice %1 {offsets = [5, 0], sizes = [1, 256], strides = [1, 1]} : vector<8x256xf32> to vector<1x256xf32>
    %39 = vector.broadcast %37 : vector<2x1xf32> to vector<2x256xf32>
    %40 = vector.broadcast %38 : vector<1x256xf32> to vector<2x256xf32>
    %41 = arith.mulf %39, %40 : vector<2x256xf32>
    %42 = arith.addf %36, %41 : vector<2x256xf32>
    %43 = vector.extract_strided_slice %2 {offsets = [0, 6], sizes = [2, 1], strides = [1, 1]} : vector<2x8xf32> to vector<2x1xf32>
    %44 = vector.extract_strided_slice %1 {offsets = [6, 0], sizes = [1, 256], strides = [1, 1]} : vector<8x256xf32> to vector<1x256xf32>
    %45 = vector.broadcast %43 : vector<2x1xf32> to vector<2x256xf32>
    %46 = vector.broadcast %44 : vector<1x256xf32> to vector<2x256xf32>
    %47 = arith.mulf %45, %46 : vector<2x256xf32>
    %48 = arith.addf %42, %47 : vector<2x256xf32>
    %49 = vector.extract_strided_slice %2 {offsets = [0, 7], sizes = [2, 1], strides = [1, 1]} : vector<2x8xf32> to vector<2x1xf32>
    %50 = vector.extract_strided_slice %1 {offsets = [7, 0], sizes = [1, 256], strides = [1, 1]} : vector<8x256xf32> to vector<1x256xf32>
    %51 = vector.broadcast %49 : vector<2x1xf32> to vector<2x256xf32>
    %52 = vector.broadcast %50 : vector<1x256xf32> to vector<2x256xf32>
    %53 = arith.mulf %51, %52 : vector<2x256xf32>
    %54 = arith.addf %48, %53 : vector<2x256xf32>
    %55 = arith.negf %54 : vector<2x256xf32>
    %56 = math.exp %55 : vector<2x256xf32>
    %cst_6 = arith.constant 1.000000e+00 : f32
    %57 = vector.broadcast %cst_6 : f32 to vector<2x256xf32>
    %58 = arith.addf %57, %56 : vector<2x256xf32>
    %59 = arith.divf %57, %58 : vector<2x256xf32>
    %60 = arith.mulf %54, %59 : vector<2x256xf32>
    %c0_7 = arith.constant 0 : index
    %c0_8 = arith.constant 0 : index
    %61 = vector.load %arg5[%c0_7, %c0_8] : memref<2x25xf32, #tpu.memory_space<vmem>>, vector<2x25xf32>
    %c0_9 = arith.constant 0 : index
    %c0_10 = arith.constant 0 : index
    %62 = vector.load %arg6[%c0_9, %c0_10] : memref<2x1xf32, #tpu.memory_space<vmem>>, vector<2x1xf32>
    %cst_11 = arith.constant 0.000000e+00 : f32
    %63 = vector.broadcast %cst_11 : f32 to vector<2x256xf32>
    %64 = vector.broadcast %62 : vector<2x1xf32> to vector<2x256xf32>
    %65 = arith.addf %63, %64 : vector<2x256xf32>
    %c34_i32 = arith.constant 34 : i32
    %66 = tpu.dynamic_rotate %60 by %c34_i32 dim 1 : vector<2x256xf32>, i32 -> vector<2x256xf32>
    %c0_12 = arith.constant 0 : index
    %c0_13 = arith.constant 0 : index
    %67 = vector.load %arg2[%c0_12, %c0_13] : memref<25x256xf32, #tpu.memory_space<vmem>>, vector<1x256xf32>
    %68 = vector.broadcast %67 : vector<1x256xf32> to vector<2x256xf32>
    %69 = arith.mulf %66, %68 : vector<2x256xf32>
    %70 = vector.extract_strided_slice %61 {offsets = [0, 0], sizes = [2, 1], strides = [1, 1]} : vector<2x25xf32> to vector<2x1xf32>
    %71 = vector.broadcast %70 : vector<2x1xf32> to vector<2x256xf32>
    %72 = arith.mulf %69, %71 : vector<2x256xf32>
    %73 = arith.addf %65, %72 : vector<2x256xf32>
    %c33_i32 = arith.constant 33 : i32
    %74 = tpu.dynamic_rotate %60 by %c33_i32 dim 1 : vector<2x256xf32>, i32 -> vector<2x256xf32>
    %c1 = arith.constant 1 : index
    %c0_14 = arith.constant 0 : index
    %75 = vector.load %arg2[%c1, %c0_14] : memref<25x256xf32, #tpu.memory_space<vmem>>, vector<1x256xf32>
    %76 = vector.broadcast %75 : vector<1x256xf32> to vector<2x256xf32>
    %77 = arith.mulf %74, %76 : vector<2x256xf32>
    %78 = vector.extract_strided_slice %61 {offsets = [0, 1], sizes = [2, 1], strides = [1, 1]} : vector<2x25xf32> to vector<2x1xf32>
    %79 = vector.broadcast %78 : vector<2x1xf32> to vector<2x256xf32>
    %80 = arith.mulf %77, %79 : vector<2x256xf32>
    %81 = arith.addf %73, %80 : vector<2x256xf32>
    %c32_i32 = arith.constant 32 : i32
    %82 = tpu.dynamic_rotate %60 by %c32_i32 dim 1 : vector<2x256xf32>, i32 -> vector<2x256xf32>
    %c2 = arith.constant 2 : index
    %c0_15 = arith.constant 0 : index
    %83 = vector.load %arg2[%c2, %c0_15] : memref<25x256xf32, #tpu.memory_space<vmem>>, vector<1x256xf32>
    %84 = vector.broadcast %83 : vector<1x256xf32> to vector<2x256xf32>
    %85 = arith.mulf %82, %84 : vector<2x256xf32>
    %86 = vector.extract_strided_slice %61 {offsets = [0, 2], sizes = [2, 1], strides = [1, 1]} : vector<2x25xf32> to vector<2x1xf32>
    %87 = vector.broadcast %86 : vector<2x1xf32> to vector<2x256xf32>
    %88 = arith.mulf %85, %87 : vector<2x256xf32>
    %89 = arith.addf %81, %88 : vector<2x256xf32>
    %c31_i32 = arith.constant 31 : i32
    %90 = tpu.dynamic_rotate %60 by %c31_i32 dim 1 : vector<2x256xf32>, i32 -> vector<2x256xf32>
    %c3 = arith.constant 3 : index
    %c0_16 = arith.constant 0 : index
    %91 = vector.load %arg2[%c3, %c0_16] : memref<25x256xf32, #tpu.memory_space<vmem>>, vector<1x256xf32>
    %92 = vector.broadcast %91 : vector<1x256xf32> to vector<2x256xf32>
    %93 = arith.mulf %90, %92 : vector<2x256xf32>
    %94 = vector.extract_strided_slice %61 {offsets = [0, 3], sizes = [2, 1], strides = [1, 1]} : vector<2x25xf32> to vector<2x1xf32>
    %95 = vector.broadcast %94 : vector<2x1xf32> to vector<2x256xf32>
    %96 = arith.mulf %93, %95 : vector<2x256xf32>
    %97 = arith.addf %89, %96 : vector<2x256xf32>
    %c30_i32 = arith.constant 30 : i32
    %98 = tpu.dynamic_rotate %60 by %c30_i32 dim 1 : vector<2x256xf32>, i32 -> vector<2x256xf32>
    %c4 = arith.constant 4 : index
    %c0_17 = arith.constant 0 : index
    %99 = vector.load %arg2[%c4, %c0_17] : memref<25x256xf32, #tpu.memory_space<vmem>>, vector<1x256xf32>
    %100 = vector.broadcast %99 : vector<1x256xf32> to vector<2x256xf32>
    %101 = arith.mulf %98, %100 : vector<2x256xf32>
    %102 = vector.extract_strided_slice %61 {offsets = [0, 4], sizes = [2, 1], strides = [1, 1]} : vector<2x25xf32> to vector<2x1xf32>
    %103 = vector.broadcast %102 : vector<2x1xf32> to vector<2x256xf32>
    %104 = arith.mulf %101, %103 : vector<2x256xf32>
    %105 = arith.addf %97, %104 : vector<2x256xf32>
    %c18_i32 = arith.constant 18 : i32
    %106 = tpu.dynamic_rotate %60 by %c18_i32 dim 1 : vector<2x256xf32>, i32 -> vector<2x256xf32>
    %c5 = arith.constant 5 : index
    %c0_18 = arith.constant 0 : index
    %107 = vector.load %arg2[%c5, %c0_18] : memref<25x256xf32, #tpu.memory_space<vmem>>, vector<1x256xf32>
    %108 = vector.broadcast %107 : vector<1x256xf32> to vector<2x256xf32>
    %109 = arith.mulf %106, %108 : vector<2x256xf32>
    %110 = vector.extract_strided_slice %61 {offsets = [0, 5], sizes = [2, 1], strides = [1, 1]} : vector<2x25xf32> to vector<2x1xf32>
    %111 = vector.broadcast %110 : vector<2x1xf32> to vector<2x256xf32>
    %112 = arith.mulf %109, %111 : vector<2x256xf32>
    %113 = arith.addf %105, %112 : vector<2x256xf32>
    %c17_i32 = arith.constant 17 : i32
    %114 = tpu.dynamic_rotate %60 by %c17_i32 dim 1 : vector<2x256xf32>, i32 -> vector<2x256xf32>
    %c6 = arith.constant 6 : index
    %c0_19 = arith.constant 0 : index
    %115 = vector.load %arg2[%c6, %c0_19] : memref<25x256xf32, #tpu.memory_space<vmem>>, vector<1x256xf32>
    %116 = vector.broadcast %115 : vector<1x256xf32> to vector<2x256xf32>
    %117 = arith.mulf %114, %116 : vector<2x256xf32>
    %118 = vector.extract_strided_slice %61 {offsets = [0, 6], sizes = [2, 1], strides = [1, 1]} : vector<2x25xf32> to vector<2x1xf32>
    %119 = vector.broadcast %118 : vector<2x1xf32> to vector<2x256xf32>
    %120 = arith.mulf %117, %119 : vector<2x256xf32>
    %121 = arith.addf %113, %120 : vector<2x256xf32>
    %c16_i32 = arith.constant 16 : i32
    %122 = tpu.dynamic_rotate %60 by %c16_i32 dim 1 : vector<2x256xf32>, i32 -> vector<2x256xf32>
    %c7 = arith.constant 7 : index
    %c0_20 = arith.constant 0 : index
    %123 = vector.load %arg2[%c7, %c0_20] : memref<25x256xf32, #tpu.memory_space<vmem>>, vector<1x256xf32>
    %124 = vector.broadcast %123 : vector<1x256xf32> to vector<2x256xf32>
    %125 = arith.mulf %122, %124 : vector<2x256xf32>
    %126 = vector.extract_strided_slice %61 {offsets = [0, 7], sizes = [2, 1], strides = [1, 1]} : vector<2x25xf32> to vector<2x1xf32>
    %127 = vector.broadcast %126 : vector<2x1xf32> to vector<2x256xf32>
    %128 = arith.mulf %125, %127 : vector<2x256xf32>
    %129 = arith.addf %121, %128 : vector<2x256xf32>
    %c15_i32 = arith.constant 15 : i32
    %130 = tpu.dynamic_rotate %60 by %c15_i32 dim 1 : vector<2x256xf32>, i32 -> vector<2x256xf32>
    %c8 = arith.constant 8 : index
    %c0_21 = arith.constant 0 : index
    %131 = vector.load %arg2[%c8, %c0_21] : memref<25x256xf32, #tpu.memory_space<vmem>>, vector<1x256xf32>
    %132 = vector.broadcast %131 : vector<1x256xf32> to vector<2x256xf32>
    %133 = arith.mulf %130, %132 : vector<2x256xf32>
    %134 = vector.extract_strided_slice %61 {offsets = [0, 8], sizes = [2, 1], strides = [1, 1]} : vector<2x25xf32> to vector<2x1xf32>
    %135 = vector.broadcast %134 : vector<2x1xf32> to vector<2x256xf32>
    %136 = arith.mulf %133, %135 : vector<2x256xf32>
    %137 = arith.addf %129, %136 : vector<2x256xf32>
    %c14_i32 = arith.constant 14 : i32
    %138 = tpu.dynamic_rotate %60 by %c14_i32 dim 1 : vector<2x256xf32>, i32 -> vector<2x256xf32>
    %c9 = arith.constant 9 : index
    %c0_22 = arith.constant 0 : index
    %139 = vector.load %arg2[%c9, %c0_22] : memref<25x256xf32, #tpu.memory_space<vmem>>, vector<1x256xf32>
    %140 = vector.broadcast %139 : vector<1x256xf32> to vector<2x256xf32>
    %141 = arith.mulf %138, %140 : vector<2x256xf32>
    %142 = vector.extract_strided_slice %61 {offsets = [0, 9], sizes = [2, 1], strides = [1, 1]} : vector<2x25xf32> to vector<2x1xf32>
    %143 = vector.broadcast %142 : vector<2x1xf32> to vector<2x256xf32>
    %144 = arith.mulf %141, %143 : vector<2x256xf32>
    %145 = arith.addf %137, %144 : vector<2x256xf32>
    %c2_i32 = arith.constant 2 : i32
    %146 = tpu.dynamic_rotate %60 by %c2_i32 dim 1 : vector<2x256xf32>, i32 -> vector<2x256xf32>
    %c10 = arith.constant 10 : index
    %c0_23 = arith.constant 0 : index
    %147 = vector.load %arg2[%c10, %c0_23] : memref<25x256xf32, #tpu.memory_space<vmem>>, vector<1x256xf32>
    %148 = vector.broadcast %147 : vector<1x256xf32> to vector<2x256xf32>
    %149 = arith.mulf %146, %148 : vector<2x256xf32>
    %150 = vector.extract_strided_slice %61 {offsets = [0, 10], sizes = [2, 1], strides = [1, 1]} : vector<2x25xf32> to vector<2x1xf32>
    %151 = vector.broadcast %150 : vector<2x1xf32> to vector<2x256xf32>
    %152 = arith.mulf %149, %151 : vector<2x256xf32>
    %153 = arith.addf %145, %152 : vector<2x256xf32>
    %c1_i32 = arith.constant 1 : i32
    %154 = tpu.dynamic_rotate %60 by %c1_i32 dim 1 : vector<2x256xf32>, i32 -> vector<2x256xf32>
    %c11 = arith.constant 11 : index
    %c0_24 = arith.constant 0 : index
    %155 = vector.load %arg2[%c11, %c0_24] : memref<25x256xf32, #tpu.memory_space<vmem>>, vector<1x256xf32>
    %156 = vector.broadcast %155 : vector<1x256xf32> to vector<2x256xf32>
    %157 = arith.mulf %154, %156 : vector<2x256xf32>
    %158 = vector.extract_strided_slice %61 {offsets = [0, 11], sizes = [2, 1], strides = [1, 1]} : vector<2x25xf32> to vector<2x1xf32>
    %159 = vector.broadcast %158 : vector<2x1xf32> to vector<2x256xf32>
    %160 = arith.mulf %157, %159 : vector<2x256xf32>
    %161 = arith.addf %153, %160 : vector<2x256xf32>
    %c12 = arith.constant 12 : index
    %c0_25 = arith.constant 0 : index
    %162 = vector.load %arg2[%c12, %c0_25] : memref<25x256xf32, #tpu.memory_space<vmem>>, vector<1x256xf32>
    %163 = vector.broadcast %162 : vector<1x256xf32> to vector<2x256xf32>
    %164 = arith.mulf %60, %163 : vector<2x256xf32>
    %165 = vector.extract_strided_slice %61 {offsets = [0, 12], sizes = [2, 1], strides = [1, 1]} : vector<2x25xf32> to vector<2x1xf32>
    %166 = vector.broadcast %165 : vector<2x1xf32> to vector<2x256xf32>
    %167 = arith.mulf %164, %166 : vector<2x256xf32>
    %168 = arith.addf %161, %167 : vector<2x256xf32>
    %c255_i32 = arith.constant 255 : i32
    %169 = tpu.dynamic_rotate %60 by %c255_i32 dim 1 : vector<2x256xf32>, i32 -> vector<2x256xf32>
    %c13 = arith.constant 13 : index
    %c0_26 = arith.constant 0 : index
    %170 = vector.load %arg2[%c13, %c0_26] : memref<25x256xf32, #tpu.memory_space<vmem>>, vector<1x256xf32>
    %171 = vector.broadcast %170 : vector<1x256xf32> to vector<2x256xf32>
    %172 = arith.mulf %169, %171 : vector<2x256xf32>
    %173 = vector.extract_strided_slice %61 {offsets = [0, 13], sizes = [2, 1], strides = [1, 1]} : vector<2x25xf32> to vector<2x1xf32>
    %174 = vector.broadcast %173 : vector<2x1xf32> to vector<2x256xf32>
    %175 = arith.mulf %172, %174 : vector<2x256xf32>
    %176 = arith.addf %168, %175 : vector<2x256xf32>
    %c254_i32 = arith.constant 254 : i32
    %177 = tpu.dynamic_rotate %60 by %c254_i32 dim 1 : vector<2x256xf32>, i32 -> vector<2x256xf32>
    %c14 = arith.constant 14 : index
    %c0_27 = arith.constant 0 : index
    %178 = vector.load %arg2[%c14, %c0_27] : memref<25x256xf32, #tpu.memory_space<vmem>>, vector<1x256xf32>
    %179 = vector.broadcast %178 : vector<1x256xf32> to vector<2x256xf32>
    %180 = arith.mulf %177, %179 : vector<2x256xf32>
    %181 = vector.extract_strided_slice %61 {offsets = [0, 14], sizes = [2, 1], strides = [1, 1]} : vector<2x25xf32> to vector<2x1xf32>
    %182 = vector.broadcast %181 : vector<2x1xf32> to vector<2x256xf32>
    %183 = arith.mulf %180, %182 : vector<2x256xf32>
    %184 = arith.addf %176, %183 : vector<2x256xf32>
    %c242_i32 = arith.constant 242 : i32
    %185 = tpu.dynamic_rotate %60 by %c242_i32 dim 1 : vector<2x256xf32>, i32 -> vector<2x256xf32>
    %c15 = arith.constant 15 : index
    %c0_28 = arith.constant 0 : index
    %186 = vector.load %arg2[%c15, %c0_28] : memref<25x256xf32, #tpu.memory_space<vmem>>, vector<1x256xf32>
    %187 = vector.broadcast %186 : vector<1x256xf32> to vector<2x256xf32>
    %188 = arith.mulf %185, %187 : vector<2x256xf32>
    %189 = vector.extract_strided_slice %61 {offsets = [0, 15], sizes = [2, 1], strides = [1, 1]} : vector<2x25xf32> to vector<2x1xf32>
    %190 = vector.broadcast %189 : vector<2x1xf32> to vector<2x256xf32>
    %191 = arith.mulf %188, %190 : vector<2x256xf32>
    %192 = arith.addf %184, %191 : vector<2x256xf32>
    %c241_i32 = arith.constant 241 : i32
    %193 = tpu.dynamic_rotate %60 by %c241_i32 dim 1 : vector<2x256xf32>, i32 -> vector<2x256xf32>
    %c16 = arith.constant 16 : index
    %c0_29 = arith.constant 0 : index
    %194 = vector.load %arg2[%c16, %c0_29] : memref<25x256xf32, #tpu.memory_space<vmem>>, vector<1x256xf32>
    %195 = vector.broadcast %194 : vector<1x256xf32> to vector<2x256xf32>
    %196 = arith.mulf %193, %195 : vector<2x256xf32>
    %197 = vector.extract_strided_slice %61 {offsets = [0, 16], sizes = [2, 1], strides = [1, 1]} : vector<2x25xf32> to vector<2x1xf32>
    %198 = vector.broadcast %197 : vector<2x1xf32> to vector<2x256xf32>
    %199 = arith.mulf %196, %198 : vector<2x256xf32>
    %200 = arith.addf %192, %199 : vector<2x256xf32>
    %c240_i32 = arith.constant 240 : i32
    %201 = tpu.dynamic_rotate %60 by %c240_i32 dim 1 : vector<2x256xf32>, i32 -> vector<2x256xf32>
    %c17 = arith.constant 17 : index
    %c0_30 = arith.constant 0 : index
    %202 = vector.load %arg2[%c17, %c0_30] : memref<25x256xf32, #tpu.memory_space<vmem>>, vector<1x256xf32>
    %203 = vector.broadcast %202 : vector<1x256xf32> to vector<2x256xf32>
    %204 = arith.mulf %201, %203 : vector<2x256xf32>
    %205 = vector.extract_strided_slice %61 {offsets = [0, 17], sizes = [2, 1], strides = [1, 1]} : vector<2x25xf32> to vector<2x1xf32>
    %206 = vector.broadcast %205 : vector<2x1xf32> to vector<2x256xf32>
    %207 = arith.mulf %204, %206 : vector<2x256xf32>
    %208 = arith.addf %200, %207 : vector<2x256xf32>
    %c239_i32 = arith.constant 239 : i32
    %209 = tpu.dynamic_rotate %60 by %c239_i32 dim 1 : vector<2x256xf32>, i32 -> vector<2x256xf32>
    %c18 = arith.constant 18 : index
    %c0_31 = arith.constant 0 : index
    %210 = vector.load %arg2[%c18, %c0_31] : memref<25x256xf32, #tpu.memory_space<vmem>>, vector<1x256xf32>
    %211 = vector.broadcast %210 : vector<1x256xf32> to vector<2x256xf32>
    %212 = arith.mulf %209, %211 : vector<2x256xf32>
    %213 = vector.extract_strided_slice %61 {offsets = [0, 18], sizes = [2, 1], strides = [1, 1]} : vector<2x25xf32> to vector<2x1xf32>
    %214 = vector.broadcast %213 : vector<2x1xf32> to vector<2x256xf32>
    %215 = arith.mulf %212, %214 : vector<2x256xf32>
    %216 = arith.addf %208, %215 : vector<2x256xf32>
    %c238_i32 = arith.constant 238 : i32
    %217 = tpu.dynamic_rotate %60 by %c238_i32 dim 1 : vector<2x256xf32>, i32 -> vector<2x256xf32>
    %c19 = arith.constant 19 : index
    %c0_32 = arith.constant 0 : index
    %218 = vector.load %arg2[%c19, %c0_32] : memref<25x256xf32, #tpu.memory_space<vmem>>, vector<1x256xf32>
    %219 = vector.broadcast %218 : vector<1x256xf32> to vector<2x256xf32>
    %220 = arith.mulf %217, %219 : vector<2x256xf32>
    %221 = vector.extract_strided_slice %61 {offsets = [0, 19], sizes = [2, 1], strides = [1, 1]} : vector<2x25xf32> to vector<2x1xf32>
    %222 = vector.broadcast %221 : vector<2x1xf32> to vector<2x256xf32>
    %223 = arith.mulf %220, %222 : vector<2x256xf32>
    %224 = arith.addf %216, %223 : vector<2x256xf32>
    %c226_i32 = arith.constant 226 : i32
    %225 = tpu.dynamic_rotate %60 by %c226_i32 dim 1 : vector<2x256xf32>, i32 -> vector<2x256xf32>
    %c20 = arith.constant 20 : index
    %c0_33 = arith.constant 0 : index
    %226 = vector.load %arg2[%c20, %c0_33] : memref<25x256xf32, #tpu.memory_space<vmem>>, vector<1x256xf32>
    %227 = vector.broadcast %226 : vector<1x256xf32> to vector<2x256xf32>
    %228 = arith.mulf %225, %227 : vector<2x256xf32>
    %229 = vector.extract_strided_slice %61 {offsets = [0, 20], sizes = [2, 1], strides = [1, 1]} : vector<2x25xf32> to vector<2x1xf32>
    %230 = vector.broadcast %229 : vector<2x1xf32> to vector<2x256xf32>
    %231 = arith.mulf %228, %230 : vector<2x256xf32>
    %232 = arith.addf %224, %231 : vector<2x256xf32>
    %c225_i32 = arith.constant 225 : i32
    %233 = tpu.dynamic_rotate %60 by %c225_i32 dim 1 : vector<2x256xf32>, i32 -> vector<2x256xf32>
    %c21 = arith.constant 21 : index
    %c0_34 = arith.constant 0 : index
    %234 = vector.load %arg2[%c21, %c0_34] : memref<25x256xf32, #tpu.memory_space<vmem>>, vector<1x256xf32>
    %235 = vector.broadcast %234 : vector<1x256xf32> to vector<2x256xf32>
    %236 = arith.mulf %233, %235 : vector<2x256xf32>
    %237 = vector.extract_strided_slice %61 {offsets = [0, 21], sizes = [2, 1], strides = [1, 1]} : vector<2x25xf32> to vector<2x1xf32>
    %238 = vector.broadcast %237 : vector<2x1xf32> to vector<2x256xf32>
    %239 = arith.mulf %236, %238 : vector<2x256xf32>
    %240 = arith.addf %232, %239 : vector<2x256xf32>
    %c224_i32 = arith.constant 224 : i32
    %241 = tpu.dynamic_rotate %60 by %c224_i32 dim 1 : vector<2x256xf32>, i32 -> vector<2x256xf32>
    %c22 = arith.constant 22 : index
    %c0_35 = arith.constant 0 : index
    %242 = vector.load %arg2[%c22, %c0_35] : memref<25x256xf32, #tpu.memory_space<vmem>>, vector<1x256xf32>
    %243 = vector.broadcast %242 : vector<1x256xf32> to vector<2x256xf32>
    %244 = arith.mulf %241, %243 : vector<2x256xf32>
    %245 = vector.extract_strided_slice %61 {offsets = [0, 22], sizes = [2, 1], strides = [1, 1]} : vector<2x25xf32> to vector<2x1xf32>
    %246 = vector.broadcast %245 : vector<2x1xf32> to vector<2x256xf32>
    %247 = arith.mulf %244, %246 : vector<2x256xf32>
    %248 = arith.addf %240, %247 : vector<2x256xf32>
    %c223_i32 = arith.constant 223 : i32
    %249 = tpu.dynamic_rotate %60 by %c223_i32 dim 1 : vector<2x256xf32>, i32 -> vector<2x256xf32>
    %c23 = arith.constant 23 : index
    %c0_36 = arith.constant 0 : index
    %250 = vector.load %arg2[%c23, %c0_36] : memref<25x256xf32, #tpu.memory_space<vmem>>, vector<1x256xf32>
    %251 = vector.broadcast %250 : vector<1x256xf32> to vector<2x256xf32>
    %252 = arith.mulf %249, %251 : vector<2x256xf32>
    %253 = vector.extract_strided_slice %61 {offsets = [0, 23], sizes = [2, 1], strides = [1, 1]} : vector<2x25xf32> to vector<2x1xf32>
    %254 = vector.broadcast %253 : vector<2x1xf32> to vector<2x256xf32>
    %255 = arith.mulf %252, %254 : vector<2x256xf32>
    %256 = arith.addf %248, %255 : vector<2x256xf32>
    %c222_i32 = arith.constant 222 : i32
    %257 = tpu.dynamic_rotate %60 by %c222_i32 dim 1 : vector<2x256xf32>, i32 -> vector<2x256xf32>
    %c24 = arith.constant 24 : index
    %c0_37 = arith.constant 0 : index
    %258 = vector.load %arg2[%c24, %c0_37] : memref<25x256xf32, #tpu.memory_space<vmem>>, vector<1x256xf32>
    %259 = vector.broadcast %258 : vector<1x256xf32> to vector<2x256xf32>
    %260 = arith.mulf %257, %259 : vector<2x256xf32>
    %261 = vector.extract_strided_slice %61 {offsets = [0, 24], sizes = [2, 1], strides = [1, 1]} : vector<2x25xf32> to vector<2x1xf32>
    %262 = vector.broadcast %261 : vector<2x1xf32> to vector<2x256xf32>
    %263 = arith.mulf %260, %262 : vector<2x256xf32>
    %264 = arith.addf %256, %263 : vector<2x256xf32>
    %265 = arith.negf %264 : vector<2x256xf32>
    %266 = math.exp %265 : vector<2x256xf32>
    %cst_38 = arith.constant 1.000000e+00 : f32
    %267 = vector.broadcast %cst_38 : f32 to vector<2x256xf32>
    %268 = arith.addf %267, %266 : vector<2x256xf32>
    %269 = arith.divf %267, %268 : vector<2x256xf32>
    %270 = arith.mulf %264, %269 : vector<2x256xf32>
    %c0_39 = arith.constant 0 : index
    %c0_40 = arith.constant 0 : index
    %271 = vector.load %arg7[%c0_39, %c0_40] : memref<4x4xf32, #tpu.memory_space<vmem>>, vector<4x4xf32>
    %c0_41 = arith.constant 0 : index
    %c0_42 = arith.constant 0 : index
    %272 = vector.load %arg8[%c0_41, %c0_42] : memref<4x1xf32, #tpu.memory_space<vmem>>, vector<4x1xf32>
    %cst_43 = arith.constant 0.000000e+00 : f32
    %273 = vector.broadcast %cst_43 : f32 to vector<4x256xf32>
    %274 = vector.broadcast %272 : vector<4x1xf32> to vector<4x256xf32>
    %275 = arith.addf %273, %274 : vector<4x256xf32>
    %276 = vector.extract_strided_slice %271 {offsets = [0, 0], sizes = [4, 1], strides = [1, 1]} : vector<4x4xf32> to vector<4x1xf32>
    %277 = vector.extract_strided_slice %60 {offsets = [0, 0], sizes = [1, 256], strides = [1, 1]} : vector<2x256xf32> to vector<1x256xf32>
    %278 = vector.broadcast %276 : vector<4x1xf32> to vector<4x256xf32>
    %279 = vector.broadcast %277 : vector<1x256xf32> to vector<4x256xf32>
    %280 = arith.mulf %278, %279 : vector<4x256xf32>
    %281 = arith.addf %275, %280 : vector<4x256xf32>
    %282 = vector.extract_strided_slice %271 {offsets = [0, 1], sizes = [4, 1], strides = [1, 1]} : vector<4x4xf32> to vector<4x1xf32>
    %283 = vector.extract_strided_slice %60 {offsets = [1, 0], sizes = [1, 256], strides = [1, 1]} : vector<2x256xf32> to vector<1x256xf32>
    %284 = vector.broadcast %282 : vector<4x1xf32> to vector<4x256xf32>
    %285 = vector.broadcast %283 : vector<1x256xf32> to vector<4x256xf32>
    %286 = arith.mulf %284, %285 : vector<4x256xf32>
    %287 = arith.addf %281, %286 : vector<4x256xf32>
    %288 = vector.extract_strided_slice %271 {offsets = [0, 2], sizes = [4, 1], strides = [1, 1]} : vector<4x4xf32> to vector<4x1xf32>
    %289 = vector.extract_strided_slice %270 {offsets = [0, 0], sizes = [1, 256], strides = [1, 1]} : vector<2x256xf32> to vector<1x256xf32>
    %290 = vector.broadcast %288 : vector<4x1xf32> to vector<4x256xf32>
    %291 = vector.broadcast %289 : vector<1x256xf32> to vector<4x256xf32>
    %292 = arith.mulf %290, %291 : vector<4x256xf32>
    %293 = arith.addf %287, %292 : vector<4x256xf32>
    %294 = vector.extract_strided_slice %271 {offsets = [0, 3], sizes = [4, 1], strides = [1, 1]} : vector<4x4xf32> to vector<4x1xf32>
    %295 = vector.extract_strided_slice %270 {offsets = [1, 0], sizes = [1, 256], strides = [1, 1]} : vector<2x256xf32> to vector<1x256xf32>
    %296 = vector.broadcast %294 : vector<4x1xf32> to vector<4x256xf32>
    %297 = vector.broadcast %295 : vector<1x256xf32> to vector<4x256xf32>
    %298 = arith.mulf %296, %297 : vector<4x256xf32>
    %299 = arith.addf %293, %298 : vector<4x256xf32>
    %c0_44 = arith.constant 0 : index
    %c0_45 = arith.constant 0 : index
    %300 = vector.load %arg9[%c0_44, %c0_45] : memref<4x25xf32, #tpu.memory_space<vmem>>, vector<4x25xf32>
    %c0_46 = arith.constant 0 : index
    %c0_47 = arith.constant 0 : index
    %301 = vector.load %arg10[%c0_46, %c0_47] : memref<4x1xf32, #tpu.memory_space<vmem>>, vector<4x1xf32>
    %cst_48 = arith.constant 0.000000e+00 : f32
    %302 = vector.broadcast %cst_48 : f32 to vector<4x256xf32>
    %303 = vector.broadcast %301 : vector<4x1xf32> to vector<4x256xf32>
    %304 = arith.addf %302, %303 : vector<4x256xf32>
    %c34_i32_49 = arith.constant 34 : i32
    %305 = tpu.dynamic_rotate %299 by %c34_i32_49 dim 1 : vector<4x256xf32>, i32 -> vector<4x256xf32>
    %c0_50 = arith.constant 0 : index
    %c0_51 = arith.constant 0 : index
    %306 = vector.load %arg2[%c0_50, %c0_51] : memref<25x256xf32, #tpu.memory_space<vmem>>, vector<1x256xf32>
    %307 = vector.broadcast %306 : vector<1x256xf32> to vector<4x256xf32>
    %308 = arith.mulf %305, %307 : vector<4x256xf32>
    %309 = vector.extract_strided_slice %300 {offsets = [0, 0], sizes = [4, 1], strides = [1, 1]} : vector<4x25xf32> to vector<4x1xf32>
    %310 = vector.broadcast %309 : vector<4x1xf32> to vector<4x256xf32>
    %311 = arith.mulf %308, %310 : vector<4x256xf32>
    %312 = arith.addf %304, %311 : vector<4x256xf32>
    %c33_i32_52 = arith.constant 33 : i32
    %313 = tpu.dynamic_rotate %299 by %c33_i32_52 dim 1 : vector<4x256xf32>, i32 -> vector<4x256xf32>
    %c1_53 = arith.constant 1 : index
    %c0_54 = arith.constant 0 : index
    %314 = vector.load %arg2[%c1_53, %c0_54] : memref<25x256xf32, #tpu.memory_space<vmem>>, vector<1x256xf32>
    %315 = vector.broadcast %314 : vector<1x256xf32> to vector<4x256xf32>
    %316 = arith.mulf %313, %315 : vector<4x256xf32>
    %317 = vector.extract_strided_slice %300 {offsets = [0, 1], sizes = [4, 1], strides = [1, 1]} : vector<4x25xf32> to vector<4x1xf32>
    %318 = vector.broadcast %317 : vector<4x1xf32> to vector<4x256xf32>
    %319 = arith.mulf %316, %318 : vector<4x256xf32>
    %320 = arith.addf %312, %319 : vector<4x256xf32>
    %c32_i32_55 = arith.constant 32 : i32
    %321 = tpu.dynamic_rotate %299 by %c32_i32_55 dim 1 : vector<4x256xf32>, i32 -> vector<4x256xf32>
    %c2_56 = arith.constant 2 : index
    %c0_57 = arith.constant 0 : index
    %322 = vector.load %arg2[%c2_56, %c0_57] : memref<25x256xf32, #tpu.memory_space<vmem>>, vector<1x256xf32>
    %323 = vector.broadcast %322 : vector<1x256xf32> to vector<4x256xf32>
    %324 = arith.mulf %321, %323 : vector<4x256xf32>
    %325 = vector.extract_strided_slice %300 {offsets = [0, 2], sizes = [4, 1], strides = [1, 1]} : vector<4x25xf32> to vector<4x1xf32>
    %326 = vector.broadcast %325 : vector<4x1xf32> to vector<4x256xf32>
    %327 = arith.mulf %324, %326 : vector<4x256xf32>
    %328 = arith.addf %320, %327 : vector<4x256xf32>
    %c31_i32_58 = arith.constant 31 : i32
    %329 = tpu.dynamic_rotate %299 by %c31_i32_58 dim 1 : vector<4x256xf32>, i32 -> vector<4x256xf32>
    %c3_59 = arith.constant 3 : index
    %c0_60 = arith.constant 0 : index
    %330 = vector.load %arg2[%c3_59, %c0_60] : memref<25x256xf32, #tpu.memory_space<vmem>>, vector<1x256xf32>
    %331 = vector.broadcast %330 : vector<1x256xf32> to vector<4x256xf32>
    %332 = arith.mulf %329, %331 : vector<4x256xf32>
    %333 = vector.extract_strided_slice %300 {offsets = [0, 3], sizes = [4, 1], strides = [1, 1]} : vector<4x25xf32> to vector<4x1xf32>
    %334 = vector.broadcast %333 : vector<4x1xf32> to vector<4x256xf32>
    %335 = arith.mulf %332, %334 : vector<4x256xf32>
    %336 = arith.addf %328, %335 : vector<4x256xf32>
    %c30_i32_61 = arith.constant 30 : i32
    %337 = tpu.dynamic_rotate %299 by %c30_i32_61 dim 1 : vector<4x256xf32>, i32 -> vector<4x256xf32>
    %c4_62 = arith.constant 4 : index
    %c0_63 = arith.constant 0 : index
    %338 = vector.load %arg2[%c4_62, %c0_63] : memref<25x256xf32, #tpu.memory_space<vmem>>, vector<1x256xf32>
    %339 = vector.broadcast %338 : vector<1x256xf32> to vector<4x256xf32>
    %340 = arith.mulf %337, %339 : vector<4x256xf32>
    %341 = vector.extract_strided_slice %300 {offsets = [0, 4], sizes = [4, 1], strides = [1, 1]} : vector<4x25xf32> to vector<4x1xf32>
    %342 = vector.broadcast %341 : vector<4x1xf32> to vector<4x256xf32>
    %343 = arith.mulf %340, %342 : vector<4x256xf32>
    %344 = arith.addf %336, %343 : vector<4x256xf32>
    %c18_i32_64 = arith.constant 18 : i32
    %345 = tpu.dynamic_rotate %299 by %c18_i32_64 dim 1 : vector<4x256xf32>, i32 -> vector<4x256xf32>
    %c5_65 = arith.constant 5 : index
    %c0_66 = arith.constant 0 : index
    %346 = vector.load %arg2[%c5_65, %c0_66] : memref<25x256xf32, #tpu.memory_space<vmem>>, vector<1x256xf32>
    %347 = vector.broadcast %346 : vector<1x256xf32> to vector<4x256xf32>
    %348 = arith.mulf %345, %347 : vector<4x256xf32>
    %349 = vector.extract_strided_slice %300 {offsets = [0, 5], sizes = [4, 1], strides = [1, 1]} : vector<4x25xf32> to vector<4x1xf32>
    %350 = vector.broadcast %349 : vector<4x1xf32> to vector<4x256xf32>
    %351 = arith.mulf %348, %350 : vector<4x256xf32>
    %352 = arith.addf %344, %351 : vector<4x256xf32>
    %c17_i32_67 = arith.constant 17 : i32
    %353 = tpu.dynamic_rotate %299 by %c17_i32_67 dim 1 : vector<4x256xf32>, i32 -> vector<4x256xf32>
    %c6_68 = arith.constant 6 : index
    %c0_69 = arith.constant 0 : index
    %354 = vector.load %arg2[%c6_68, %c0_69] : memref<25x256xf32, #tpu.memory_space<vmem>>, vector<1x256xf32>
    %355 = vector.broadcast %354 : vector<1x256xf32> to vector<4x256xf32>
    %356 = arith.mulf %353, %355 : vector<4x256xf32>
    %357 = vector.extract_strided_slice %300 {offsets = [0, 6], sizes = [4, 1], strides = [1, 1]} : vector<4x25xf32> to vector<4x1xf32>
    %358 = vector.broadcast %357 : vector<4x1xf32> to vector<4x256xf32>
    %359 = arith.mulf %356, %358 : vector<4x256xf32>
    %360 = arith.addf %352, %359 : vector<4x256xf32>
    %c16_i32_70 = arith.constant 16 : i32
    %361 = tpu.dynamic_rotate %299 by %c16_i32_70 dim 1 : vector<4x256xf32>, i32 -> vector<4x256xf32>
    %c7_71 = arith.constant 7 : index
    %c0_72 = arith.constant 0 : index
    %362 = vector.load %arg2[%c7_71, %c0_72] : memref<25x256xf32, #tpu.memory_space<vmem>>, vector<1x256xf32>
    %363 = vector.broadcast %362 : vector<1x256xf32> to vector<4x256xf32>
    %364 = arith.mulf %361, %363 : vector<4x256xf32>
    %365 = vector.extract_strided_slice %300 {offsets = [0, 7], sizes = [4, 1], strides = [1, 1]} : vector<4x25xf32> to vector<4x1xf32>
    %366 = vector.broadcast %365 : vector<4x1xf32> to vector<4x256xf32>
    %367 = arith.mulf %364, %366 : vector<4x256xf32>
    %368 = arith.addf %360, %367 : vector<4x256xf32>
    %c15_i32_73 = arith.constant 15 : i32
    %369 = tpu.dynamic_rotate %299 by %c15_i32_73 dim 1 : vector<4x256xf32>, i32 -> vector<4x256xf32>
    %c8_74 = arith.constant 8 : index
    %c0_75 = arith.constant 0 : index
    %370 = vector.load %arg2[%c8_74, %c0_75] : memref<25x256xf32, #tpu.memory_space<vmem>>, vector<1x256xf32>
    %371 = vector.broadcast %370 : vector<1x256xf32> to vector<4x256xf32>
    %372 = arith.mulf %369, %371 : vector<4x256xf32>
    %373 = vector.extract_strided_slice %300 {offsets = [0, 8], sizes = [4, 1], strides = [1, 1]} : vector<4x25xf32> to vector<4x1xf32>
    %374 = vector.broadcast %373 : vector<4x1xf32> to vector<4x256xf32>
    %375 = arith.mulf %372, %374 : vector<4x256xf32>
    %376 = arith.addf %368, %375 : vector<4x256xf32>
    %c14_i32_76 = arith.constant 14 : i32
    %377 = tpu.dynamic_rotate %299 by %c14_i32_76 dim 1 : vector<4x256xf32>, i32 -> vector<4x256xf32>
    %c9_77 = arith.constant 9 : index
    %c0_78 = arith.constant 0 : index
    %378 = vector.load %arg2[%c9_77, %c0_78] : memref<25x256xf32, #tpu.memory_space<vmem>>, vector<1x256xf32>
    %379 = vector.broadcast %378 : vector<1x256xf32> to vector<4x256xf32>
    %380 = arith.mulf %377, %379 : vector<4x256xf32>
    %381 = vector.extract_strided_slice %300 {offsets = [0, 9], sizes = [4, 1], strides = [1, 1]} : vector<4x25xf32> to vector<4x1xf32>
    %382 = vector.broadcast %381 : vector<4x1xf32> to vector<4x256xf32>
    %383 = arith.mulf %380, %382 : vector<4x256xf32>
    %384 = arith.addf %376, %383 : vector<4x256xf32>
    %c2_i32_79 = arith.constant 2 : i32
    %385 = tpu.dynamic_rotate %299 by %c2_i32_79 dim 1 : vector<4x256xf32>, i32 -> vector<4x256xf32>
    %c10_80 = arith.constant 10 : index
    %c0_81 = arith.constant 0 : index
    %386 = vector.load %arg2[%c10_80, %c0_81] : memref<25x256xf32, #tpu.memory_space<vmem>>, vector<1x256xf32>
    %387 = vector.broadcast %386 : vector<1x256xf32> to vector<4x256xf32>
    %388 = arith.mulf %385, %387 : vector<4x256xf32>
    %389 = vector.extract_strided_slice %300 {offsets = [0, 10], sizes = [4, 1], strides = [1, 1]} : vector<4x25xf32> to vector<4x1xf32>
    %390 = vector.broadcast %389 : vector<4x1xf32> to vector<4x256xf32>
    %391 = arith.mulf %388, %390 : vector<4x256xf32>
    %392 = arith.addf %384, %391 : vector<4x256xf32>
    %c1_i32_82 = arith.constant 1 : i32
    %393 = tpu.dynamic_rotate %299 by %c1_i32_82 dim 1 : vector<4x256xf32>, i32 -> vector<4x256xf32>
    %c11_83 = arith.constant 11 : index
    %c0_84 = arith.constant 0 : index
    %394 = vector.load %arg2[%c11_83, %c0_84] : memref<25x256xf32, #tpu.memory_space<vmem>>, vector<1x256xf32>
    %395 = vector.broadcast %394 : vector<1x256xf32> to vector<4x256xf32>
    %396 = arith.mulf %393, %395 : vector<4x256xf32>
    %397 = vector.extract_strided_slice %300 {offsets = [0, 11], sizes = [4, 1], strides = [1, 1]} : vector<4x25xf32> to vector<4x1xf32>
    %398 = vector.broadcast %397 : vector<4x1xf32> to vector<4x256xf32>
    %399 = arith.mulf %396, %398 : vector<4x256xf32>
    %400 = arith.addf %392, %399 : vector<4x256xf32>
    %c12_85 = arith.constant 12 : index
    %c0_86 = arith.constant 0 : index
    %401 = vector.load %arg2[%c12_85, %c0_86] : memref<25x256xf32, #tpu.memory_space<vmem>>, vector<1x256xf32>
    %402 = vector.broadcast %401 : vector<1x256xf32> to vector<4x256xf32>
    %403 = arith.mulf %299, %402 : vector<4x256xf32>
    %404 = vector.extract_strided_slice %300 {offsets = [0, 12], sizes = [4, 1], strides = [1, 1]} : vector<4x25xf32> to vector<4x1xf32>
    %405 = vector.broadcast %404 : vector<4x1xf32> to vector<4x256xf32>
    %406 = arith.mulf %403, %405 : vector<4x256xf32>
    %407 = arith.addf %400, %406 : vector<4x256xf32>
    %c255_i32_87 = arith.constant 255 : i32
    %408 = tpu.dynamic_rotate %299 by %c255_i32_87 dim 1 : vector<4x256xf32>, i32 -> vector<4x256xf32>
    %c13_88 = arith.constant 13 : index
    %c0_89 = arith.constant 0 : index
    %409 = vector.load %arg2[%c13_88, %c0_89] : memref<25x256xf32, #tpu.memory_space<vmem>>, vector<1x256xf32>
    %410 = vector.broadcast %409 : vector<1x256xf32> to vector<4x256xf32>
    %411 = arith.mulf %408, %410 : vector<4x256xf32>
    %412 = vector.extract_strided_slice %300 {offsets = [0, 13], sizes = [4, 1], strides = [1, 1]} : vector<4x25xf32> to vector<4x1xf32>
    %413 = vector.broadcast %412 : vector<4x1xf32> to vector<4x256xf32>
    %414 = arith.mulf %411, %413 : vector<4x256xf32>
    %415 = arith.addf %407, %414 : vector<4x256xf32>
    %c254_i32_90 = arith.constant 254 : i32
    %416 = tpu.dynamic_rotate %299 by %c254_i32_90 dim 1 : vector<4x256xf32>, i32 -> vector<4x256xf32>
    %c14_91 = arith.constant 14 : index
    %c0_92 = arith.constant 0 : index
    %417 = vector.load %arg2[%c14_91, %c0_92] : memref<25x256xf32, #tpu.memory_space<vmem>>, vector<1x256xf32>
    %418 = vector.broadcast %417 : vector<1x256xf32> to vector<4x256xf32>
    %419 = arith.mulf %416, %418 : vector<4x256xf32>
    %420 = vector.extract_strided_slice %300 {offsets = [0, 14], sizes = [4, 1], strides = [1, 1]} : vector<4x25xf32> to vector<4x1xf32>
    %421 = vector.broadcast %420 : vector<4x1xf32> to vector<4x256xf32>
    %422 = arith.mulf %419, %421 : vector<4x256xf32>
    %423 = arith.addf %415, %422 : vector<4x256xf32>
    %c242_i32_93 = arith.constant 242 : i32
    %424 = tpu.dynamic_rotate %299 by %c242_i32_93 dim 1 : vector<4x256xf32>, i32 -> vector<4x256xf32>
    %c15_94 = arith.constant 15 : index
    %c0_95 = arith.constant 0 : index
    %425 = vector.load %arg2[%c15_94, %c0_95] : memref<25x256xf32, #tpu.memory_space<vmem>>, vector<1x256xf32>
    %426 = vector.broadcast %425 : vector<1x256xf32> to vector<4x256xf32>
    %427 = arith.mulf %424, %426 : vector<4x256xf32>
    %428 = vector.extract_strided_slice %300 {offsets = [0, 15], sizes = [4, 1], strides = [1, 1]} : vector<4x25xf32> to vector<4x1xf32>
    %429 = vector.broadcast %428 : vector<4x1xf32> to vector<4x256xf32>
    %430 = arith.mulf %427, %429 : vector<4x256xf32>
    %431 = arith.addf %423, %430 : vector<4x256xf32>
    %c241_i32_96 = arith.constant 241 : i32
    %432 = tpu.dynamic_rotate %299 by %c241_i32_96 dim 1 : vector<4x256xf32>, i32 -> vector<4x256xf32>
    %c16_97 = arith.constant 16 : index
    %c0_98 = arith.constant 0 : index
    %433 = vector.load %arg2[%c16_97, %c0_98] : memref<25x256xf32, #tpu.memory_space<vmem>>, vector<1x256xf32>
    %434 = vector.broadcast %433 : vector<1x256xf32> to vector<4x256xf32>
    %435 = arith.mulf %432, %434 : vector<4x256xf32>
    %436 = vector.extract_strided_slice %300 {offsets = [0, 16], sizes = [4, 1], strides = [1, 1]} : vector<4x25xf32> to vector<4x1xf32>
    %437 = vector.broadcast %436 : vector<4x1xf32> to vector<4x256xf32>
    %438 = arith.mulf %435, %437 : vector<4x256xf32>
    %439 = arith.addf %431, %438 : vector<4x256xf32>
    %c240_i32_99 = arith.constant 240 : i32
    %440 = tpu.dynamic_rotate %299 by %c240_i32_99 dim 1 : vector<4x256xf32>, i32 -> vector<4x256xf32>
    %c17_100 = arith.constant 17 : index
    %c0_101 = arith.constant 0 : index
    %441 = vector.load %arg2[%c17_100, %c0_101] : memref<25x256xf32, #tpu.memory_space<vmem>>, vector<1x256xf32>
    %442 = vector.broadcast %441 : vector<1x256xf32> to vector<4x256xf32>
    %443 = arith.mulf %440, %442 : vector<4x256xf32>
    %444 = vector.extract_strided_slice %300 {offsets = [0, 17], sizes = [4, 1], strides = [1, 1]} : vector<4x25xf32> to vector<4x1xf32>
    %445 = vector.broadcast %444 : vector<4x1xf32> to vector<4x256xf32>
    %446 = arith.mulf %443, %445 : vector<4x256xf32>
    %447 = arith.addf %439, %446 : vector<4x256xf32>
    %c239_i32_102 = arith.constant 239 : i32
    %448 = tpu.dynamic_rotate %299 by %c239_i32_102 dim 1 : vector<4x256xf32>, i32 -> vector<4x256xf32>
    %c18_103 = arith.constant 18 : index
    %c0_104 = arith.constant 0 : index
    %449 = vector.load %arg2[%c18_103, %c0_104] : memref<25x256xf32, #tpu.memory_space<vmem>>, vector<1x256xf32>
    %450 = vector.broadcast %449 : vector<1x256xf32> to vector<4x256xf32>
    %451 = arith.mulf %448, %450 : vector<4x256xf32>
    %452 = vector.extract_strided_slice %300 {offsets = [0, 18], sizes = [4, 1], strides = [1, 1]} : vector<4x25xf32> to vector<4x1xf32>
    %453 = vector.broadcast %452 : vector<4x1xf32> to vector<4x256xf32>
    %454 = arith.mulf %451, %453 : vector<4x256xf32>
    %455 = arith.addf %447, %454 : vector<4x256xf32>
    %c238_i32_105 = arith.constant 238 : i32
    %456 = tpu.dynamic_rotate %299 by %c238_i32_105 dim 1 : vector<4x256xf32>, i32 -> vector<4x256xf32>
    %c19_106 = arith.constant 19 : index
    %c0_107 = arith.constant 0 : index
    %457 = vector.load %arg2[%c19_106, %c0_107] : memref<25x256xf32, #tpu.memory_space<vmem>>, vector<1x256xf32>
    %458 = vector.broadcast %457 : vector<1x256xf32> to vector<4x256xf32>
    %459 = arith.mulf %456, %458 : vector<4x256xf32>
    %460 = vector.extract_strided_slice %300 {offsets = [0, 19], sizes = [4, 1], strides = [1, 1]} : vector<4x25xf32> to vector<4x1xf32>
    %461 = vector.broadcast %460 : vector<4x1xf32> to vector<4x256xf32>
    %462 = arith.mulf %459, %461 : vector<4x256xf32>
    %463 = arith.addf %455, %462 : vector<4x256xf32>
    %c226_i32_108 = arith.constant 226 : i32
    %464 = tpu.dynamic_rotate %299 by %c226_i32_108 dim 1 : vector<4x256xf32>, i32 -> vector<4x256xf32>
    %c20_109 = arith.constant 20 : index
    %c0_110 = arith.constant 0 : index
    %465 = vector.load %arg2[%c20_109, %c0_110] : memref<25x256xf32, #tpu.memory_space<vmem>>, vector<1x256xf32>
    %466 = vector.broadcast %465 : vector<1x256xf32> to vector<4x256xf32>
    %467 = arith.mulf %464, %466 : vector<4x256xf32>
    %468 = vector.extract_strided_slice %300 {offsets = [0, 20], sizes = [4, 1], strides = [1, 1]} : vector<4x25xf32> to vector<4x1xf32>
    %469 = vector.broadcast %468 : vector<4x1xf32> to vector<4x256xf32>
    %470 = arith.mulf %467, %469 : vector<4x256xf32>
    %471 = arith.addf %463, %470 : vector<4x256xf32>
    %c225_i32_111 = arith.constant 225 : i32
    %472 = tpu.dynamic_rotate %299 by %c225_i32_111 dim 1 : vector<4x256xf32>, i32 -> vector<4x256xf32>
    %c21_112 = arith.constant 21 : index
    %c0_113 = arith.constant 0 : index
    %473 = vector.load %arg2[%c21_112, %c0_113] : memref<25x256xf32, #tpu.memory_space<vmem>>, vector<1x256xf32>
    %474 = vector.broadcast %473 : vector<1x256xf32> to vector<4x256xf32>
    %475 = arith.mulf %472, %474 : vector<4x256xf32>
    %476 = vector.extract_strided_slice %300 {offsets = [0, 21], sizes = [4, 1], strides = [1, 1]} : vector<4x25xf32> to vector<4x1xf32>
    %477 = vector.broadcast %476 : vector<4x1xf32> to vector<4x256xf32>
    %478 = arith.mulf %475, %477 : vector<4x256xf32>
    %479 = arith.addf %471, %478 : vector<4x256xf32>
    %c224_i32_114 = arith.constant 224 : i32
    %480 = tpu.dynamic_rotate %299 by %c224_i32_114 dim 1 : vector<4x256xf32>, i32 -> vector<4x256xf32>
    %c22_115 = arith.constant 22 : index
    %c0_116 = arith.constant 0 : index
    %481 = vector.load %arg2[%c22_115, %c0_116] : memref<25x256xf32, #tpu.memory_space<vmem>>, vector<1x256xf32>
    %482 = vector.broadcast %481 : vector<1x256xf32> to vector<4x256xf32>
    %483 = arith.mulf %480, %482 : vector<4x256xf32>
    %484 = vector.extract_strided_slice %300 {offsets = [0, 22], sizes = [4, 1], strides = [1, 1]} : vector<4x25xf32> to vector<4x1xf32>
    %485 = vector.broadcast %484 : vector<4x1xf32> to vector<4x256xf32>
    %486 = arith.mulf %483, %485 : vector<4x256xf32>
    %487 = arith.addf %479, %486 : vector<4x256xf32>
    %c223_i32_117 = arith.constant 223 : i32
    %488 = tpu.dynamic_rotate %299 by %c223_i32_117 dim 1 : vector<4x256xf32>, i32 -> vector<4x256xf32>
    %c23_118 = arith.constant 23 : index
    %c0_119 = arith.constant 0 : index
    %489 = vector.load %arg2[%c23_118, %c0_119] : memref<25x256xf32, #tpu.memory_space<vmem>>, vector<1x256xf32>
    %490 = vector.broadcast %489 : vector<1x256xf32> to vector<4x256xf32>
    %491 = arith.mulf %488, %490 : vector<4x256xf32>
    %492 = vector.extract_strided_slice %300 {offsets = [0, 23], sizes = [4, 1], strides = [1, 1]} : vector<4x25xf32> to vector<4x1xf32>
    %493 = vector.broadcast %492 : vector<4x1xf32> to vector<4x256xf32>
    %494 = arith.mulf %491, %493 : vector<4x256xf32>
    %495 = arith.addf %487, %494 : vector<4x256xf32>
    %c222_i32_120 = arith.constant 222 : i32
    %496 = tpu.dynamic_rotate %299 by %c222_i32_120 dim 1 : vector<4x256xf32>, i32 -> vector<4x256xf32>
    %c24_121 = arith.constant 24 : index
    %c0_122 = arith.constant 0 : index
    %497 = vector.load %arg2[%c24_121, %c0_122] : memref<25x256xf32, #tpu.memory_space<vmem>>, vector<1x256xf32>
    %498 = vector.broadcast %497 : vector<1x256xf32> to vector<4x256xf32>
    %499 = arith.mulf %496, %498 : vector<4x256xf32>
    %500 = vector.extract_strided_slice %300 {offsets = [0, 24], sizes = [4, 1], strides = [1, 1]} : vector<4x25xf32> to vector<4x1xf32>
    %501 = vector.broadcast %500 : vector<4x1xf32> to vector<4x256xf32>
    %502 = arith.mulf %499, %501 : vector<4x256xf32>
    %503 = arith.addf %495, %502 : vector<4x256xf32>
    %504 = vector.extract_strided_slice %1 {offsets = [0, 0], sizes = [4, 256], strides = [1, 1]} : vector<8x256xf32> to vector<4x256xf32>
    %505 = arith.addf %299, %504 : vector<4x256xf32>
    %c0_123 = arith.constant 0 : index
    %c0_124 = arith.constant 0 : index
    %c0_125 = arith.constant 0 : index
    %506 = vector.load %arg11[%c0_123, %c0_124, %c0_125] : memref<1x8x256xf32, #tpu.memory_space<vmem>>, vector<1x4x256xf32>
    %507 = vector.shape_cast %506 : vector<1x4x256xf32> to vector<4x256xf32>
    %508 = vector.shape_cast %505 : vector<4x256xf32> to vector<1x4x256xf32>
    tpu.vector_store %arg11[%c0_123, %c0_124, %c0_125], %508 {strides = array<i32>} : memref<1x8x256xf32, #tpu.memory_space<vmem>>, vector<1x4x256xf32>,
    %509 = vector.extract_strided_slice %1 {offsets = [4, 0], sizes = [4, 256], strides = [1, 1]} : vector<8x256xf32> to vector<4x256xf32>
    %510 = arith.addf %503, %509 : vector<4x256xf32>
    %c0_126 = arith.constant 0 : index
    %c4_127 = arith.constant 4 : index
    %c0_128 = arith.constant 0 : index
    %511 = vector.load %arg11[%c0_126, %c4_127, %c0_128] : memref<1x8x256xf32, #tpu.memory_space<vmem>>, vector<1x4x256xf32>
    %512 = vector.shape_cast %511 : vector<1x4x256xf32> to vector<4x256xf32>
    %513 = vector.shape_cast %510 : vector<4x256xf32> to vector<1x4x256xf32>
    tpu.vector_store %arg11[%c0_126, %c4_127, %c0_128], %513 {strides = array<i32>} : memref<1x8x256xf32, #tpu.memory_space<vmem>>, vector<1x4x256xf32>,
    return
  }
  func.func @transform_0(%arg0: i32) -> (i32, i32, i32) {
    %c0_i32 = arith.constant 0 : i32
    %c0_i32_0 = arith.constant 0 : i32
    %c0_i32_1 = arith.constant 0 : i32
    return %arg0, %c0_i32, %c0_i32_0 : i32, i32, i32
  }
  func.func @transform_1(%arg0: i32) -> (i32, i32) {
    %c0_i32 = arith.constant 0 : i32
    %c0_i32_0 = arith.constant 0 : i32
    %c0_i32_1 = arith.constant 0 : i32
    return %c0_i32, %c0_i32_0 : i32, i32
  }
  func.func @transform_2(%arg0: i32) -> (i32, i32) {
    %c0_i32 = arith.constant 0 : i32
    %c0_i32_0 = arith.constant 0 : i32
    %c0_i32_1 = arith.constant 0 : i32
    return %c0_i32, %c0_i32_0 : i32, i32
  }
  func.func @transform_3(%arg0: i32) -> (i32, i32) {
    %c0_i32 = arith.constant 0 : i32
    %c0_i32_0 = arith.constant 0 : i32
    %c0_i32_1 = arith.constant 0 : i32
    return %c0_i32, %c0_i32_0 : i32, i32
  }
  func.func @transform_4(%arg0: i32) -> (i32, i32) {
    %c0_i32 = arith.constant 0 : i32
    %c0_i32_0 = arith.constant 0 : i32
    %c0_i32_1 = arith.constant 0 : i32
    return %c0_i32, %c0_i32_0 : i32, i32
  }
  func.func @transform_5(%arg0: i32) -> (i32, i32) {
    %c0_i32 = arith.constant 0 : i32
    %c0_i32_0 = arith.constant 0 : i32
    %c0_i32_1 = arith.constant 0 : i32
    return %c0_i32, %c0_i32_0 : i32, i32
  }
  func.func @transform_6(%arg0: i32) -> (i32, i32) {
    %c0_i32 = arith.constant 0 : i32
    %c0_i32_0 = arith.constant 0 : i32
    %c0_i32_1 = arith.constant 0 : i32
    return %c0_i32, %c0_i32_0 : i32, i32
  }
  func.func @transform_7(%arg0: i32) -> (i32, i32) {
    %c0_i32 = arith.constant 0 : i32
    %c0_i32_0 = arith.constant 0 : i32
    %c0_i32_1 = arith.constant 0 : i32
    return %c0_i32, %c0_i32_0 : i32, i32
  }
  func.func @transform_8(%arg0: i32) -> (i32, i32) {
    %c0_i32 = arith.constant 0 : i32
    %c0_i32_0 = arith.constant 0 : i32
    %c0_i32_1 = arith.constant 0 : i32
    return %c0_i32, %c0_i32_0 : i32, i32
  }
  func.func @transform_9(%arg0: i32) -> (i32, i32) {
    %c0_i32 = arith.constant 0 : i32
    %c0_i32_0 = arith.constant 0 : i32
    %c0_i32_1 = arith.constant 0 : i32
    return %c0_i32, %c0_i32_0 : i32, i32
  }
  func.func @transform_10(%arg0: i32) -> (i32, i32, i32) {
    %c0_i32 = arith.constant 0 : i32
    %c0_i32_0 = arith.constant 0 : i32
    %c0_i32_1 = arith.constant 0 : i32
    return %arg0, %c0_i32, %c0_i32_0 : i32, i32, i32
  }
}

</mosaic_0001>

<llo_original>
// kernel: ghost_bottleneck_forward.1
$region0: #{ghost_bottleneck_forward.1}
  #allocation0 [shape = 'u32[]', space=smem, size = 0x4, offset = 0x4, fixed_abs, tag = 'smem constant byte address 0x4 - core index']
  #allocation1 [shape = 'u32[144,128]{1,0:T(1,128)}', space=vmem, size = 0x12000, scoped, tag = 'internal scratch']
  %s0 = inlined_call_operand.vmem [shape: f32[2,8,256], index: 0, kind: input, shape index: {}]
  %s1 = inlined_call_operand.vmem [shape: f32[25,256], index: 1, kind: input, shape index: {}]
  %s2 = inlined_call_operand.vmem [shape: f32[2,8], index: 2, kind: input, shape index: {}]
  %s3 = inlined_call_operand.vmem [shape: f32[2,1], index: 3, kind: input, shape index: {}]
  %s4 = inlined_call_operand.vmem [shape: f32[2,25], index: 4, kind: input, shape index: {}]
  %s5 = inlined_call_operand.vmem [shape: f32[2,1], index: 5, kind: input, shape index: {}]
  %s6 = inlined_call_operand.vmem [shape: f32[4,4], index: 6, kind: input, shape index: {}]
  %s7 = inlined_call_operand.vmem [shape: f32[4,1], index: 7, kind: input, shape index: {}]
  %s8 = inlined_call_operand.vmem [shape: f32[4,25], index: 8, kind: input, shape index: {}]
  %s9 = inlined_call_operand.vmem [shape: f32[4,1], index: 9, kind: input, shape index: {}]
  %s10 = inlined_call_operand.vmem [shape: f32[2,8,256], index: 10, kind: output, shape index: {}]
  %s11 = sld [smem:[#allocation0]]
  $region73: #{ghost_bottleneck_forward.1} parent=0
    _
  %s13 = ssub.s32 1, %s11
  %s14 = scalar_select 0, %s13, %s11
  loop: start=0, step=1, limit=4
  $region2: #{ghost_bottleneck_forward.1} parent=0 // loop_pre_header
    _
  $region3: #{ghost_bottleneck_forward.1} parent=0 // loop_header
    %s16 = sphi 0, %s20
    %p17 = scmp.ge.s32.totalorder %s16, 4
    %s26 = sphi 0, %s28
    %s29 = sphi 0, %s26
    %s30 = sphi 0, %s29
    %s46 = sphi 0, %s30
    %s50 = sphi 0, %s50
    %s52 = sphi 0, %s50
    %s53 = sphi 0, %s52
    %s67 = sphi 0, %s53
    %s71 = sphi 0, %s71
    %s73 = sphi 0, %s71
    %s74 = sphi 0, %s73
    %s88 = sphi 0, %s74
    %s92 = sphi 0, %s92
    %s94 = sphi 0, %s92
    %s95 = sphi 0, %s94
    %s109 = sphi 0, %s95
    %s113 = sphi 0, %s113
    %s115 = sphi 0, %s113
    %s116 = sphi 0, %s115
    %s130 = sphi 0, %s116
    %s134 = sphi 0, %s134
    %s136 = sphi 0, %s134
    %s137 = sphi 0, %s136
    %s151 = sphi 0, %s137
    %s155 = sphi 0, %s155
    %s157 = sphi 0, %s155
    %s158 = sphi 0, %s157
    %s172 = sphi 0, %s158
    %s176 = sphi 0, %s176
    %s178 = sphi 0, %s176
    %s179 = sphi 0, %s178
    %s193 = sphi 0, %s179
    %s197 = sphi 0, %s197
    %s199 = sphi 0, %s197
    %s200 = sphi 0, %s199
    %s214 = sphi 0, %s200
    %s218 = sphi 0, %s218
    %s220 = sphi 0, %s218
    %s221 = sphi 0, %s220
    %s235 = sphi 0, %s221
    %s241 = sphi 0, %s243
    %s244 = sphi 0, %s241
    %s245 = sphi 0, %s244
    %s261 = sphi 0, %s245
  $region4: #{ghost_bottleneck_forward.1} parent=0 // loop_header_branch
    %19 = sbr.rel (%p17) target = $region8
  $region5: #{ghost_bottleneck_forward.1} parent=0 // loop_body
    %s21 = ssub.s32 %s16, 1
    %s22 = ssub.s32 %s16, 2
    %s23 = sadd.s32 %s16, 1
    %s24 = ssub.s32 %s16, %s23
    %p25 = scmp.eq.s32.totalorder %s24, 0
    %s27 = sadd.s32 %s26, 1
    %s28 = scalar_select %p25, %s26, %s27
    %p31 = pneg %p25
    %p32 = scmp.eq.s32.totalorder %s16, 1
    %p33 = por %p31, %p32
    %p34 = scmp.ne.s32.totalorder %s26, %s29
    %p35 = scmp.eq.s32.totalorder %s16, 0
    %p36 = por %p34, %p35
    %p37 = scmp.ne.s32.totalorder %s26, %s29
    %p38 = scmp.eq.s32.totalorder %s21, 1
    %p39 = por %p37, %p38
    %p40 = scmp.ne.s32.totalorder %s29, %s30
    %p41 = scmp.eq.s32.totalorder %s21, 0
    %p42 = por %p40, %p41
    %p43 = scmp.ne.s32.totalorder %s29, %s30
    %p44 = scmp.eq.s32.totalorder %s22, 1
    %p45 = por %p43, %p44
    %p47 = scmp.ne.s32.totalorder %s30, %s46
    %p48 = scmp.eq.s32.totalorder %s22, 0
    %p49 = por %p47, %p48
    %s51 = sadd.s32 %s50, 1
    %p54 = scmp.eq.s32.totalorder %s16, 1
    %p55 = scmp.ne.s32.totalorder %s50, %s52
    %p56 = scmp.eq.s32.totalorder %s16, 0
    %p57 = por %p55, %p56
    %p58 = scmp.ne.s32.totalorder %s50, %s52
    %p59 = scmp.eq.s32.totalorder %s21, 1
    %p60 = por %p58, %p59
    %p61 = scmp.ne.s32.totalorder %s52, %s53
    %p62 = scmp.eq.s32.totalorder %s21, 0
    %p63 = por %p61, %p62
    %p64 = scmp.ne.s32.totalorder %s52, %s53
    %p65 = scmp.eq.s32.totalorder %s22, 1
    %p66 = por %p64, %p65
    %p68 = scmp.ne.s32.totalorder %s53, %s67
    %p69 = scmp.eq.s32.totalorder %s22, 0
    %p70 = por %p68, %p69
    %s72 = sadd.s32 %s71, 1
    %p75 = scmp.eq.s32.totalorder %s16, 1
    %p76 = scmp.ne.s32.totalorder %s71, %s73
    %p77 = scmp.eq.s32.totalorder %s16, 0
    %p78 = por %p76, %p77
    %p79 = scmp.ne.s32.totalorder %s71, %s73
    %p80 = scmp.eq.s32.totalorder %s21, 1
    %p81 = por %p79, %p80
    %p82 = scmp.ne.s32.totalorder %s73, %s74
    %p83 = scmp.eq.s32.totalorder %s21, 0
    %p84 = por %p82, %p83
    %p85 = scmp.ne.s32.totalorder %s73, %s74
    %p86 = scmp.eq.s32.totalorder %s22, 1
    %p87 = por %p85, %p86
    %p89 = scmp.ne.s32.totalorder %s74, %s88
    %p90 = scmp.eq.s32.totalorder %s22, 0
    %p91 = por %p89, %p90
    %s93 = sadd.s32 %s92, 1
    %p96 = scmp.eq.s32.totalorder %s16, 1
    %p97 = scmp.ne.s32.totalorder %s92, %s94
    %p98 = scmp.eq.s32.totalorder %s16, 0
    %p99 = por %p97, %p98
    %p100 = scmp.ne.s32.totalorder %s92, %s94
    %p101 = scmp.eq.s32.totalorder %s21, 1
    %p102 = por %p100, %p101
    %p103 = scmp.ne.s32.totalorder %s94, %s95
    %p104 = scmp.eq.s32.totalorder %s21, 0
    %p105 = por %p103, %p104
    %p106 = scmp.ne.s32.totalorder %s94, %s95
    %p107 = scmp.eq.s32.totalorder %s22, 1
    %p108 = por %p106, %p107
    %p110 = scmp.ne.s32.totalorder %s95, %s109
    %p111 = scmp.eq.s32.totalorder %s22, 0
    %p112 = por %p110, %p111
    %s114 = sadd.s32 %s113, 1
    %p117 = scmp.eq.s32.totalorder %s16, 1
    %p118 = scmp.ne.s32.totalorder %s113, %s115
    %p119 = scmp.eq.s32.totalorder %s16, 0
    %p120 = por %p118, %p119
    %p121 = scmp.ne.s32.totalorder %s113, %s115
    %p122 = scmp.eq.s32.totalorder %s21, 1
    %p123 = por %p121, %p122
    %p124 = scmp.ne.s32.totalorder %s115, %s116
    %p125 = scmp.eq.s32.totalorder %s21, 0
    %p126 = por %p124, %p125
    %p127 = scmp.ne.s32.totalorder %s115, %s116
    %p128 = scmp.eq.s32.totalorder %s22, 1
    %p129 = por %p127, %p128
    %p131 = scmp.ne.s32.totalorder %s116, %s130
    %p132 = scmp.eq.s32.totalorder %s22, 0
    %p133 = por %p131, %p132
    %s135 = sadd.s32 %s134, 1
    %p138 = scmp.eq.s32.totalorder %s16, 1
    %p139 = scmp.ne.s32.totalorder %s134, %s136
    %p140 = scmp.eq.s32.totalorder %s16, 0
    %p141 = por %p139, %p140
    %p142 = scmp.ne.s32.totalorder %s134, %s136
    %p143 = scmp.eq.s32.totalorder %s21, 1
    %p144 = por %p142, %p143
    %p145 = scmp.ne.s32.totalorder %s136, %s137
    %p146 = scmp.eq.s32.totalorder %s21, 0
    %p147 = por %p145, %p146
    %p148 = scmp.ne.s32.totalorder %s136, %s137
    %p149 = scmp.eq.s32.totalorder %s22, 1
    %p150 = por %p148, %p149
    %p152 = scmp.ne.s32.totalorder %s137, %s151
    %p153 = scmp.eq.s32.totalorder %s22, 0
    %p154 = por %p152, %p153
    %s156 = sadd.s32 %s155, 1
    %p159 = scmp.eq.s32.totalorder %s16, 1
    %p160 = scmp.ne.s32.totalorder %s155, %s157
    %p161 = scmp.eq.s32.totalorder %s16, 0
    %p162 = por %p160, %p161
    %p163 = scmp.ne.s32.totalorder %s155, %s157
    %p164 = scmp.eq.s32.totalorder %s21, 1
    %p165 = por %p163, %p164
    %p166 = scmp.ne.s32.totalorder %s157, %s158
    %p167 = scmp.eq.s32.totalorder %s21, 0
    %p168 = por %p166, %p167
    %p169 = scmp.ne.s32.totalorder %s157, %s158
    %p170 = scmp.eq.s32.totalorder %s22, 1
    %p171 = por %p169, %p170
    %p173 = scmp.ne.s32.totalorder %s158, %s172
    %p174 = scmp.eq.s32.totalorder %s22, 0
    %p175 = por %p173, %p174
    %s177 = sadd.s32 %s176, 1
    %p180 = scmp.eq.s32.totalorder %s16, 1
    %p181 = scmp.ne.s32.totalorder %s176, %s178
    %p182 = scmp.eq.s32.totalorder %s16, 0
    %p183 = por %p181, %p182
    %p184 = scmp.ne.s32.totalorder %s176, %s178
    %p185 = scmp.eq.s32.totalorder %s21, 1
    %p186 = por %p184, %p185
    %p187 = scmp.ne.s32.totalorder %s178, %s179
    %p188 = scmp.eq.s32.totalorder %s21, 0
    %p189 = por %p187, %p188
    %p190 = scmp.ne.s32.totalorder %s178, %s179
    %p191 = scmp.eq.s32.totalorder %s22, 1
    %p192 = por %p190, %p191
    %p194 = scmp.ne.s32.totalorder %s179, %s193
    %p195 = scmp.eq.s32.totalorder %s22, 0
    %p196 = por %p194, %p195
    %s198 = sadd.s32 %s197, 1
    %p201 = scmp.eq.s32.totalorder %s16, 1
    %p202 = scmp.ne.s32.totalorder %s197, %s199
    %p203 = scmp.eq.s32.totalorder %s16, 0
    %p204 = por %p202, %p203
    %p205 = scmp.ne.s32.totalorder %s197, %s199
    %p206 = scmp.eq.s32.totalorder %s21, 1
    %p207 = por %p205, %p206
    %p208 = scmp.ne.s32.totalorder %s199, %s200
    %p209 = scmp.eq.s32.totalorder %s21, 0
    %p210 = por %p208, %p209
    %p211 = scmp.ne.s32.totalorder %s199, %s200
    %p212 = scmp.eq.s32.totalorder %s22, 1
    %p213 = por %p211, %p212
    %p215 = scmp.ne.s32.totalorder %s200, %s214
    %p216 = scmp.eq.s32.totalorder %s22, 0
    %p217 = por %p215, %p216
    %s219 = sadd.s32 %s218, 1
    %p222 = scmp.eq.s32.totalorder %s16, 1
    %p223 = scmp.ne.s32.totalorder %s218, %s220
    %p224 = scmp.eq.s32.totalorder %s16, 0
    %p225 = por %p223, %p224
    %p226 = scmp.ne.s32.totalorder %s218, %s220
    %p227 = scmp.eq.s32.totalorder %s21, 1
    %p228 = por %p226, %p227
    %p229 = scmp.ne.s32.totalorder %s220, %s221
    %p230 = scmp.eq.s32.totalorder %s21, 0
    %p231 = por %p229, %p230
    %p232 = scmp.ne.s32.totalorder %s220, %s221
    %p233 = scmp.eq.s32.totalorder %s22, 1
    %p234 = por %p232, %p233
    %p236 = scmp.ne.s32.totalorder %s221, %s235
    %p237 = scmp.eq.s32.totalorder %s22, 0
    %p238 = por %p236, %p237
    %s239 = ssub.s32 %s16, %s23
    %p240 = scmp.eq.s32.totalorder %s239, 0
    %s242 = sadd.s32 %s241, 1
    %s243 = scalar_select %p240, %s241, %s242
    %p246 = pneg %p240
    %p247 = scmp.eq.s32.totalorder %s16, 1
    %p248 = por %p246, %p247
    %p249 = scmp.ne.s32.totalorder %s241, %s244
    %p250 = scmp.eq.s32.totalorder %s16, 0
    %p251 = por %p249, %p250
    %p252 = scmp.ne.s32.totalorder %s241, %s244
    %p253 = scmp.eq.s32.totalorder %s21, 1
    %p254 = por %p252, %p253
    %p255 = scmp.ne.s32.totalorder %s244, %s245
    %p256 = scmp.eq.s32.totalorder %s21, 0
    %p257 = por %p255, %p256
    %p258 = scmp.ne.s32.totalorder %s244, %s245
    %p259 = scmp.eq.s32.totalorder %s22, 1
    %p260 = por %p258, %p259
    %p262 = scmp.ne.s32.totalorder %s245, %s261
    %p263 = scmp.eq.s32.totalorder %s22, 0
    %p264 = por %p262, %p263
    %p265 = scmp.le.s32.totalorder 1, %s16
    %p266 = scmp.lt.s32.totalorder %s16, 3
    %p267 = pnand %p265, %p266
    %p268 = pneg %p267
    // Predicated region
    $region9: #{ghost_bottleneck_forward.1} parent=5 // pred_check
      _
    $region10: #{ghost_bottleneck_forward.1} parent=5 // pred_check_branch
      %270 = sbr.rel (%p267) target = $region12
    $region11: #{ghost_bottleneck_forward.1} parent=5 // pred_region
      %s271 = ssub.s32 %s16, 1
      // Predicated region
      $region13: #{ghost_bottleneck_forward.1} parent=11 // pred_check
        %p272 = pneg %p63
      $region14: #{ghost_bottleneck_forward.1} parent=11 // pred_check_branch
        %274 = sbr.rel (%p272) target = $region16
      $region15: #{ghost_bottleneck_forward.1} parent=11 // pred_region
        _
      $region16: #{ghost_bottleneck_forward.1} parent=11 // pred_fallthru
        _
      // Predicated region
      $region17: #{ghost_bottleneck_forward.1} parent=11 // pred_check
        %p275 = pneg %p84
      $region18: #{ghost_bottleneck_forward.1} parent=11 // pred_check_branch
        %277 = sbr.rel (%p275) target = $region20
      $region19: #{ghost_bottleneck_forward.1} parent=11 // pred_region
        _
      $region20: #{ghost_bottleneck_forward.1} parent=11 // pred_fallthru
        _
      // Predicated region
      $region21: #{ghost_bottleneck_forward.1} parent=11 // pred_check
        %p278 = pneg %p105
      $region22: #{ghost_bottleneck_forward.1} parent=11 // pred_check_branch
        %280 = sbr.rel (%p278) target = $region24
      $region23: #{ghost_bottleneck_forward.1} parent=11 // pred_region
        _
      $region24: #{ghost_bottleneck_forward.1} parent=11 // pred_fallthru
        _
      // Predicated region
      $region25: #{ghost_bottleneck_forward.1} parent=11 // pred_check
        %p281 = pneg %p126
      $region26: #{ghost_bottleneck_forward.1} parent=11 // pred_check_branch
        %283 = sbr.rel (%p281) target = $region28
      $region27: #{ghost_bottleneck_forward.1} parent=11 // pred_region
        _
      $region28: #{ghost_bottleneck_forward.1} parent=11 // pred_fallthru
        _
      // Predicated region
      $region29: #{ghost_bottleneck_forward.1} parent=11 // pred_check
        %p284 = pneg %p147
      $region30: #{ghost_bottleneck_forward.1} parent=11 // pred_check_branch
        %286 = sbr.rel (%p284) target = $region32
      $region31: #{ghost_bottleneck_forward.1} parent=11 // pred_region
        _
      $region32: #{ghost_bottleneck_forward.1} parent=11 // pred_fallthru
        _
      // Predicated region
      $region33: #{ghost_bottleneck_forward.1} parent=11 // pred_check
        %p287 = pneg %p168
      $region34: #{ghost_bottleneck_forward.1} parent=11 // pred_check_branch
        %289 = sbr.rel (%p287) target = $region36
      $region35: #{ghost_bottleneck_forward.1} parent=11 // pred_region
        _
      $region36: #{ghost_bottleneck_forward.1} parent=11 // pred_fallthru
        _
      // Predicated region
      $region37: #{ghost_bottleneck_forward.1} parent=11 // pred_check
        %p290 = pneg %p189
      $region38: #{ghost_bottleneck_forward.1} parent=11 // pred_check_branch
        %292 = sbr.rel (%p290) target = $region40
      $region39: #{ghost_bottleneck_forward.1} parent=11 // pred_region
        _
      $region40: #{ghost_bottleneck_forward.1} parent=11 // pred_fallthru
        _
      // Predicated region
      $region41: #{ghost_bottleneck_forward.1} parent=11 // pred_check
        %p293 = pneg %p210
      $region42: #{ghost_bottleneck_forward.1} parent=11 // pred_check_branch
        %295 = sbr.rel (%p293) target = $region44
      $region43: #{ghost_bottleneck_forward.1} parent=11 // pred_region
        _
      $region44: #{ghost_bottleneck_forward.1} parent=11 // pred_fallthru
        _
      // Predicated region
      $region45: #{ghost_bottleneck_forward.1} parent=11 // pred_check
        %p296 = pneg %p231
      $region46: #{ghost_bottleneck_forward.1} parent=11 // pred_check_branch
        %298 = sbr.rel (%p296) target = $region48
      $region47: #{ghost_bottleneck_forward.1} parent=11 // pred_region
        _
      $region48: #{ghost_bottleneck_forward.1} parent=11 // pred_fallthru
        _
    $region12: #{ghost_bottleneck_forward.1} parent=5 // pred_fallthru
      _
    %p299 = scmp.lt.s32.totalorder %s16, 2
    // Predicated region
    $region49: #{ghost_bottleneck_forward.1} parent=5 // pred_check
      %p300 = pneg %p299
    $region50: #{ghost_bottleneck_forward.1} parent=5 // pred_check_branch
      %302 = sbr.rel (%p300) target = $region52
    $region51: #{ghost_bottleneck_forward.1} parent=5 // pred_region
      // Predicated region
      $region53: #{ghost_bottleneck_forward.1} parent=51 // pred_check
        %p303 = pneg %p36
      $region54: #{ghost_bottleneck_forward.1} parent=51 // pred_check_branch
        %305 = sbr.rel (%p303) target = $region56
      $region55: #{ghost_bottleneck_forward.1} parent=51 // pred_region
        %p306 = scmp.lt.s32.totalorder %s16, 1
        %s307 = scalar_select %p306, %s16, 1
        %s308 = smul.addr %s307, 2
        %s309 = smul.addr %s308, 8
        %s310 = scalar_lea.vmem %s0, %s309
      $region56: #{ghost_bottleneck_forward.1} parent=51 // pred_fallthru
        _
    $region52: #{ghost_bottleneck_forward.1} parent=5 // pred_fallthru
      _
    %p311 = scmp.le.s32.totalorder 1, %s16
    %p312 = scmp.lt.s32.totalorder %s16, 3
    %p313 = pnand %p311, %p312
    %p314 = pneg %p313
    // Predicated region
    $region57: #{ghost_bottleneck_forward.1} parent=5 // pred_check
      _
    $region58: #{ghost_bottleneck_forward.1} parent=5 // pred_check_branch
      %316 = sbr.rel (%p313) target = $region60
    $region59: #{ghost_bottleneck_forward.1} parent=5 // pred_region
      %s317 = ssub.s32 %s16, 1
      %p318 = scmp.lt.s32.totalorder %s21, 1
      %s319 = scalar_select %p318, %s21, 1
      %s320 = smul.addr %s319, 2
      %s321 = smul.addr %s320, 8
      %s322 = scalar_lea.vmem %s0, %s321
      %p323 = pneg %p42
      %p324 = pneg %p39
      %p325 = pneg %p63
      %p326 = pneg %p60
      %p327 = pneg %p84
      %p328 = pneg %p81
      %p329 = pneg %p105
      %p330 = pneg %p102
      %p331 = pneg %p126
      %p332 = pneg %p123
      %p333 = pneg %p147
      %p334 = pneg %p144
      %p335 = pneg %p168
      %p336 = pneg %p165
      %p337 = pneg %p189
      %p338 = pneg %p186
      %p339 = pneg %p210
      %p340 = pneg %p207
      %p341 = pneg %p231
      %p342 = pneg %p228
      %p343 = pneg %p257
      %p344 = pneg %p254
      %p345 = scmp.lt.s32.totalorder %s21, 1
      %s346 = scalar_select %p345, %s21, 1
      %s347 = smul.addr %s346, 2
      %s348 = smul.addr %s347, 8
      %s349 = scalar_lea.vmem %s10, %s348
      %p350 = scmp.lt.s32.totalorder %s21, 1
      %s351 = scalar_select %p350, %s21, 1
      %s352 = smul.addr %s351, 2
      %s353 = smul.addr %s352, 8
      %s354 = scalar_lea.vmem %s0, %s353
      %p355 = scmp.lt.s32.totalorder %s21, 1
      %s356 = scalar_select %p355, %s21, 1
      %s357 = smul.addr %s356, 2
      %s358 = smul.addr %s357, 8
      %s359 = scalar_lea.vmem %s10, %s358
      %v360 = vld [vmem:[%s354] sm:$0xff]
      %v361 = vld [vmem:[%s354 + $0x8] sm:$0xff]
      %v362 = vld [vmem:[%s2] sm:$0x3]
      %v363 = vld [vmem:[%s3] sm:$0x3]
      %365 = vset.pattern.permute.xlu0 0
      %366 = vperm.xlu0 %365, %v363
      %v367 = vpop.permute.xlu0 %366
      %v369 = vadd.f32 %v367, 0.0
      %371 = vset.pattern.permute.xlu0 0
      %372 = vperm.xlu0 %371, %v362
      %v373 = vpop.permute.xlu0 %372
      %v375 = vlaneseq
      %v376 = vshrl.u32 %v375, 7
      %v377 = vsub.s32 0, %v376
      %v378 = vrot.slane %v360, %v377
      %v379 = vlaneseq
      %v380 = vshrl.u32 %v379, 7
      %v381 = vsub.s32 0, %v380
      %v382 = vrot.slane %v361, %v381
      %v383 = vmul.f32 %v373, %v378
      %v384 = vmul.f32 %v373, %v382
      %v385 = vadd.f32 %v369, %v383
      %v386 = vadd.f32 %v369, %v384
      %387 = vset.pattern.permute.xlu0 1
      %388 = vperm.xlu0 %387, %v362
      %v389 = vpop.permute.xlu0 %388
      %v391 = vlaneseq
      %v392 = vshrl.u32 %v391, 7
      %v393 = vsub.s32 1, %v392
      %v394 = vrot.slane %v360, %v393
      %v395 = vlaneseq
      %v396 = vshrl.u32 %v395, 7
      %v397 = vsub.s32 1, %v396
      %v398 = vrot.slane %v361, %v397
      %v399 = vmul.f32 %v389, %v394
      %v400 = vmul.f32 %v389, %v398
      %v401 = vadd.f32 %v385, %v399
      %v402 = vadd.f32 %v386, %v400
      %403 = vset.pattern.permute.xlu0 2
      %404 = vperm.xlu0 %403, %v362
      %v405 = vpop.permute.xlu0 %404
      %v407 = vlaneseq
      %v408 = vshrl.u32 %v407, 7
      %v409 = vsub.s32 2, %v408
      %v410 = vrot.slane %v360, %v409
      %v411 = vlaneseq
      %v412 = vshrl.u32 %v411, 7
      %v413 = vsub.s32 2, %v412
      %v414 = vrot.slane %v361, %v413
      %v415 = vmul.f32 %v405, %v410
      %v416 = vmul.f32 %v405, %v414
      %v417 = vadd.f32 %v401, %v415
      %v418 = vadd.f32 %v402, %v416
      %419 = vset.pattern.permute.xlu0 3
      %420 = vperm.xlu0 %419, %v362
      %v421 = vpop.permute.xlu0 %420
      %v423 = vlaneseq
      %v424 = vshrl.u32 %v423, 7
      %v425 = vsub.s32 3, %v424
      %v426 = vrot.slane %v360, %v425
      %v427 = vlaneseq
      %v428 = vshrl.u32 %v427, 7
      %v429 = vsub.s32 3, %v428
      %v430 = vrot.slane %v361, %v429
      %v431 = vmul.f32 %v421, %v426
      %v432 = vmul.f32 %v421, %v430
      %v433 = vadd.f32 %v417, %v431
      %v434 = vadd.f32 %v418, %v432
      %435 = vset.pattern.permute.xlu0 4
      %436 = vperm.xlu0 %435, %v362
      %v437 = vpop.permute.xlu0 %436
      %v439 = vlaneseq
      %v440 = vshrl.u32 %v439, 7
      %v441 = vsub.s32 4, %v440
      %v442 = vrot.slane %v360, %v441
      %v443 = vlaneseq
      %v444 = vshrl.u32 %v443, 7
      %v445 = vsub.s32 4, %v444
      %v446 = vrot.slane %v361, %v445
      %v447 = vmul.f32 %v437, %v442
      %v448 = vmul.f32 %v437, %v446
      %v449 = vadd.f32 %v433, %v447
      %v450 = vadd.f32 %v434, %v448
      %451 = vset.pattern.permute.xlu0 5
      %452 = vperm.xlu0 %451, %v362
      %v453 = vpop.permute.xlu0 %452
      %v455 = vlaneseq
      %v456 = vshrl.u32 %v455, 7
      %v457 = vsub.s32 5, %v456
      %v458 = vrot.slane %v360, %v457
      %v459 = vlaneseq
      %v460 = vshrl.u32 %v459, 7
      %v461 = vsub.s32 5, %v460
      %v462 = vrot.slane %v361, %v461
      %v463 = vmul.f32 %v453, %v458
      %v464 = vmul.f32 %v453, %v462
      %v465 = vadd.f32 %v449, %v463
      %v466 = vadd.f32 %v450, %v464
      %467 = vset.pattern.permute.xlu0 6
      %468 = vperm.xlu0 %467, %v362
      %v469 = vpop.permute.xlu0 %468
      %v471 = vlaneseq
      %v472 = vshrl.u32 %v471, 7
      %v473 = vsub.s32 6, %v472
      %v474 = vrot.slane %v360, %v473
      %v475 = vlaneseq
      %v476 = vshrl.u32 %v475, 7
      %v477 = vsub.s32 6, %v476
      %v478 = vrot.slane %v361, %v477
      %v479 = vmul.f32 %v469, %v474
      %v480 = vmul.f32 %v469, %v478
      %v481 = vadd.f32 %v465, %v479
      %v482 = vadd.f32 %v466, %v480
      %483 = vset.pattern.permute.xlu0 7
      %484 = vperm.xlu0 %483, %v362
      %v485 = vpop.permute.xlu0 %484
      %v487 = vlaneseq
      %v488 = vshrl.u32 %v487, 7
      %v489 = vsub.s32 7, %v488
      %v490 = vrot.slane %v360, %v489
      %v491 = vlaneseq
      %v492 = vshrl.u32 %v491, 7
      %v493 = vsub.s32 7, %v492
      %v494 = vrot.slane %v361, %v493
      %v495 = vmul.f32 %v485, %v490
      %v496 = vmul.f32 %v485, %v494
      %v497 = vadd.f32 %v481, %v495
      %v498 = vadd.f32 %v482, %v496
      %v499 = vxor.u32 %v497, 2147483648
      %v500 = vxor.u32 %v498, 2147483648
      %v501 = vmul.f32 %v499, 1.442695
      %v502 = vpow.pop %v501
      %v503 = vmul.f32 %v500, 1.442695
      %v504 = vpow.pop %v503
      %v505 = vadd.f32 %v502, 1.0
      %v506 = vadd.f32 %v504, 1.0
      %v507 = vrcp.pop %v505
      %v508 = vmul.f32 1.0, %v507
      %v509 = vrcp.pop %v506
      %v510 = vmul.f32 1.0, %v509
      %v511 = vmul.f32 %v497, %v508
      %v512 = vmul.f32 %v498, %v510
      %v513 = vld [vmem:[%s4] sm:$0x3]
      %v514 = vld [vmem:[%s5] sm:$0x3]
      %516 = vset.pattern.permute.xlu0 0
      %517 = vperm.xlu0 %516, %v514
      %v518 = vpop.permute.xlu0 %517
      %v520 = vadd.f32 %v518, 0.0
      %521 = vrot.lane.b32.xlu0 %v511, 34
      %v522 = vpop.permute.xlu0 %521
      %523 = vrot.lane.b32.xlu0 %v512, 34
      %v524 = vpop.permute.xlu0 %523
      %v525 = vlaneseq
      %v526 = vand.u32 %v525, 127
      %vm527 = vcmp.lt.s32.totalorder %v526, 34
      %v528 = vsel %vm527, %v522, %v524
      %v529 = vsel %vm527, %v524, %v522
      %v530 = vld [vmem:[%s1] ss:$8 sm:$0x3]
      %v532 = vlaneseq
      %v533 = vshrl.u32 %v532, 7
      %v534 = vsub.s32 0, %v533
      %v535 = vrot.slane %v530, %v534
      %v536 = vlaneseq
      %v537 = vshrl.u32 %v536, 7
      %v538 = vsub.s32 1, %v537
      %v539 = vrot.slane %v530, %v538
      %v542 = vmul.f32 %v529, %v535
      %v543 = vmul.f32 %v528, %v539
      %545 = vset.pattern.permute.xlu0 0
      %546 = vperm.xlu0 %545, %v513
      %v547 = vpop.permute.xlu0 %546
      %v549 = vmul.f32 %v542, %v547
      %v550 = vmul.f32 %v543, %v547
      %v551 = vadd.f32 %v520, %v549
      %v552 = vadd.f32 %v520, %v550
      %553 = vrot.lane.b32.xlu0 %v511, 33
      %v554 = vpop.permute.xlu0 %553
      %555 = vrot.lane.b32.xlu0 %v512, 33
      %v556 = vpop.permute.xlu0 %555
      %vm557 = vcmp.lt.s32.totalorder %v526, 33
      %v558 = vsel %vm557, %v554, %v556
      %v559 = vsel %vm557, %v556, %v554
      %s560 = scalar_lea.vmem %s1, 1
      %v561 = vld [vmem:[%s560] ss:$8 sm:$0x3]
      %v563 = vlaneseq
      %v564 = vshrl.u32 %v563, 7
      %v565 = vsub.s32 0, %v564
      %v566 = vrot.slane %v561, %v565
      %v567 = vlaneseq
      %v568 = vshrl.u32 %v567, 7
      %v569 = vsub.s32 1, %v568
      %v570 = vrot.slane %v561, %v569
      %v573 = vmul.f32 %v559, %v566
      %v574 = vmul.f32 %v558, %v570
      %575 = vset.pattern.permute.xlu0 1
      %576 = vperm.xlu0 %575, %v513
      %v577 = vpop.permute.xlu0 %576
      %v579 = vmul.f32 %v573, %v577
      %v580 = vmul.f32 %v574, %v577
      %v581 = vadd.f32 %v551, %v579
      %v582 = vadd.f32 %v552, %v580
      %583 = vrot.lane.b32.xlu0 %v511, 32
      %v584 = vpop.permute.xlu0 %583
      %585 = vrot.lane.b32.xlu0 %v512, 32
      %v586 = vpop.permute.xlu0 %585
      %vm587 = vcmp.lt.s32.totalorder %v526, 32
      %v588 = vsel %vm587, %v584, %v586
      %v589 = vsel %vm587, %v586, %v584
      %s590 = scalar_lea.vmem %s1, 2
      %v591 = vld [vmem:[%s590] ss:$8 sm:$0x3]
      %v593 = vlaneseq
      %v594 = vshrl.u32 %v593, 7
      %v595 = vsub.s32 0, %v594
      %v596 = vrot.slane %v591, %v595
      %v597 = vlaneseq
      %v598 = vshrl.u32 %v597, 7
      %v599 = vsub.s32 1, %v598
      %v600 = vrot.slane %v591, %v599
      %v603 = vmul.f32 %v589, %v596
      %v604 = vmul.f32 %v588, %v600
      %605 = vset.pattern.permute.xlu0 2
      %606 = vperm.xlu0 %605, %v513
      %v607 = vpop.permute.xlu0 %606
      %v609 = vmul.f32 %v603, %v607
      %v610 = vmul.f32 %v604, %v607
      %v611 = vadd.f32 %v581, %v609
      %v612 = vadd.f32 %v582, %v610
      %613 = vrot.lane.b32.xlu0 %v511, 31
      %v614 = vpop.permute.xlu0 %613
      %615 = vrot.lane.b32.xlu0 %v512, 31
      %v616 = vpop.permute.xlu0 %615
      %vm617 = vcmp.lt.s32.totalorder %v526, 31
      %v618 = vsel %vm617, %v614, %v616
      %v619 = vsel %vm617, %v616, %v614
      %s620 = scalar_lea.vmem %s1, 3
      %v621 = vld [vmem:[%s620] ss:$8 sm:$0x3]
      %v623 = vlaneseq
      %v624 = vshrl.u32 %v623, 7
      %v625 = vsub.s32 0, %v624
      %v626 = vrot.slane %v621, %v625
      %v627 = vlaneseq
      %v628 = vshrl.u32 %v627, 7
      %v629 = vsub.s32 1, %v628
      %v630 = vrot.slane %v621, %v629
      %v633 = vmul.f32 %v619, %v626
      %v634 = vmul.f32 %v618, %v630
      %635 = vset.pattern.permute.xlu0 3
      %636 = vperm.xlu0 %635, %v513
      %v637 = vpop.permute.xlu0 %636
      %v639 = vmul.f32 %v633, %v637
      %v640 = vmul.f32 %v634, %v637
      %v641 = vadd.f32 %v611, %v639
      %v642 = vadd.f32 %v612, %v640
      %643 = vrot.lane.b32.xlu0 %v511, 30
      %v644 = vpop.permute.xlu0 %643
      %645 = vrot.lane.b32.xlu0 %v512, 30
      %v646 = vpop.permute.xlu0 %645
      %vm647 = vcmp.lt.s32.totalorder %v526, 30
      %v648 = vsel %vm647, %v644, %v646
      %v649 = vsel %vm647, %v646, %v644
      %s650 = scalar_lea.vmem %s1, 4
      %v651 = vld [vmem:[%s650] ss:$8 sm:$0x3]
      %v653 = vlaneseq
      %v654 = vshrl.u32 %v653, 7
      %v655 = vsub.s32 0, %v654
      %v656 = vrot.slane %v651, %v655
      %v657 = vlaneseq
      %v658 = vshrl.u32 %v657, 7
      %v659 = vsub.s32 1, %v658
      %v660 = vrot.slane %v651, %v659
      %v663 = vmul.f32 %v649, %v656
      %v664 = vmul.f32 %v648, %v660
      %665 = vset.pattern.permute.xlu0 4
      %666 = vperm.xlu0 %665, %v513
      %v667 = vpop.permute.xlu0 %666
      %v669 = vmul.f32 %v663, %v667
      %v670 = vmul.f32 %v664, %v667
      %v671 = vadd.f32 %v641, %v669
      %v672 = vadd.f32 %v642, %v670
      %673 = vrot.lane.b32.xlu0 %v511, 18
      %v674 = vpop.permute.xlu0 %673
      %675 = vrot.lane.b32.xlu0 %v512, 18
      %v676 = vpop.permute.xlu0 %675
      %vm677 = vcmp.lt.s32.totalorder %v526, 18
      %v678 = vsel %vm677, %v674, %v676
      %v679 = vsel %vm677, %v676, %v674
      %s680 = scalar_lea.vmem %s1, 5
      %v681 = vld [vmem:[%s680] ss:$8 sm:$0x3]
      %v683 = vlaneseq
      %v684 = vshrl.u32 %v683, 7
      %v685 = vsub.s32 0, %v684
      %v686 = vrot.slane %v681, %v685
      %v687 = vlaneseq
      %v688 = vshrl.u32 %v687, 7
      %v689 = vsub.s32 1, %v688
      %v690 = vrot.slane %v681, %v689
      %v693 = vmul.f32 %v679, %v686
      %v694 = vmul.f32 %v678, %v690
      %695 = vset.pattern.permute.xlu0 5
      %696 = vperm.xlu0 %695, %v513
      %v697 = vpop.permute.xlu0 %696
      %v699 = vmul.f32 %v693, %v697
      %v700 = vmul.f32 %v694, %v697
      %v701 = vadd.f32 %v671, %v699
      %v702 = vadd.f32 %v672, %v700
      %703 = vrot.lane.b32.xlu0 %v511, 17
      %v704 = vpop.permute.xlu0 %703
      %705 = vrot.lane.b32.xlu0 %v512, 17
      %v706 = vpop.permute.xlu0 %705
      %vm707 = vcmp.lt.s32.totalorder %v526, 17
      %v708 = vsel %vm707, %v704, %v706
      %v709 = vsel %vm707, %v706, %v704
      %s710 = scalar_lea.vmem %s1, 6
      %v711 = vld [vmem:[%s710] ss:$8 sm:$0x3]
      %v713 = vlaneseq
      %v714 = vshrl.u32 %v713, 7
      %v715 = vsub.s32 0, %v714
      %v716 = vrot.slane %v711, %v715
      %v717 = vlaneseq
      %v718 = vshrl.u32 %v717, 7
      %v719 = vsub.s32 1, %v718
      %v720 = vrot.slane %v711, %v719
      %v723 = vmul.f32 %v709, %v716
      %v724 = vmul.f32 %v708, %v720
      %725 = vset.pattern.permute.xlu0 6
      %726 = vperm.xlu0 %725, %v513
      %v727 = vpop.permute.xlu0 %726
      %v729 = vmul.f32 %v723, %v727
      %v730 = vmul.f32 %v724, %v727
      %v731 = vadd.f32 %v701, %v729
      %v732 = vadd.f32 %v702, %v730
      %733 = vrot.lane.b32.xlu0 %v511, 16
      %v734 = vpop.permute.xlu0 %733
      %735 = vrot.lane.b32.xlu0 %v512, 16
      %v736 = vpop.permute.xlu0 %735
      %vm737 = vcmp.lt.s32.totalorder %v526, 16
      %v738 = vsel %vm737, %v734, %v736
      %v739 = vsel %vm737, %v736, %v734
      %s740 = scalar_lea.vmem %s1, 7
      %v741 = vld [vmem:[%s740] ss:$8 sm:$0x3]
      %v743 = vlaneseq
      %v744 = vshrl.u32 %v743, 7
      %v745 = vsub.s32 0, %v744
      %v746 = vrot.slane %v741, %v745
      %v747 = vlaneseq
      %v748 = vshrl.u32 %v747, 7
      %v749 = vsub.s32 1, %v748
      %v750 = vrot.slane %v741, %v749
      %v753 = vmul.f32 %v739, %v746
      %v754 = vmul.f32 %v738, %v750
      %755 = vset.pattern.permute.xlu0 7
      %756 = vperm.xlu0 %755, %v513
      %v757 = vpop.permute.xlu0 %756
      %v759 = vmul.f32 %v753, %v757
      %v760 = vmul.f32 %v754, %v757
      %v761 = vadd.f32 %v731, %v759
      %v762 = vadd.f32 %v732, %v760
      %763 = vrot.lane.b32.xlu0 %v511, 15
      %v764 = vpop.permute.xlu0 %763
      %765 = vrot.lane.b32.xlu0 %v512, 15
      %v766 = vpop.permute.xlu0 %765
      %vm767 = vcmp.lt.s32.totalorder %v526, 15
      %v768 = vsel %vm767, %v764, %v766
      %v769 = vsel %vm767, %v766, %v764
      %s770 = scalar_lea.vmem %s1, 16
      %v771 = vld [vmem:[%s770] ss:$8 sm:$0x3]
      %v773 = vlaneseq
      %v774 = vshrl.u32 %v773, 7
      %v775 = vsub.s32 0, %v774
      %v776 = vrot.slane %v771, %v775
      %v777 = vlaneseq
      %v778 = vshrl.u32 %v777, 7
      %v779 = vsub.s32 1, %v778
      %v780 = vrot.slane %v771, %v779
      %v783 = vmul.f32 %v769, %v776
      %v784 = vmul.f32 %v768, %v780
      %785 = vset.pattern.permute.xlu0 8
      %786 = vperm.xlu0 %785, %v513
      %v787 = vpop.permute.xlu0 %786
      %v789 = vmul.f32 %v783, %v787
      %v790 = vmul.f32 %v784, %v787
      %v791 = vadd.f32 %v761, %v789
      %v792 = vadd.f32 %v762, %v790
      %793 = vrot.lane.b32.xlu0 %v511, 14
      %v794 = vpop.permute.xlu0 %793
      %795 = vrot.lane.b32.xlu0 %v512, 14
      %v796 = vpop.permute.xlu0 %795
      %vm797 = vcmp.lt.s32.totalorder %v526, 14
      %v798 = vsel %vm797, %v794, %v796
      %v799 = vsel %vm797, %v796, %v794
      %s800 = scalar_lea.vmem %s1, 17
      %v801 = vld [vmem:[%s800] ss:$8 sm:$0x3]
      %v803 = vlaneseq
      %v804 = vshrl.u32 %v803, 7
      %v805 = vsub.s32 0, %v804
      %v806 = vrot.slane %v801, %v805
      %v807 = vlaneseq
      %v808 = vshrl.u32 %v807, 7
      %v809 = vsub.s32 1, %v808
      %v810 = vrot.slane %v801, %v809
      %v813 = vmul.f32 %v799, %v806
      %v814 = vmul.f32 %v798, %v810
      %815 = vset.pattern.permute.xlu0 9
      %816 = vperm.xlu0 %815, %v513
      %v817 = vpop.permute.xlu0 %816
      %v819 = vmul.f32 %v813, %v817
      %v820 = vmul.f32 %v814, %v817
      %v821 = vadd.f32 %v791, %v819
      %v822 = vadd.f32 %v792, %v820
      %823 = vrot.lane.b32.xlu0 %v511, 2
      %v824 = vpop.permute.xlu0 %823
      %825 = vrot.lane.b32.xlu0 %v512, 2
      %v826 = vpop.permute.xlu0 %825
      %vm827 = vcmp.lt.s32.totalorder %v526, 2
      %v828 = vsel %vm827, %v824, %v826
      %v829 = vsel %vm827, %v826, %v824
      %s830 = scalar_lea.vmem %s1, 18
      %v831 = vld [vmem:[%s830] ss:$8 sm:$0x3]
      %v833 = vlaneseq
      %v834 = vshrl.u32 %v833, 7
      %v835 = vsub.s32 0, %v834
      %v836 = vrot.slane %v831, %v835
      %v837 = vlaneseq
      %v838 = vshrl.u32 %v837, 7
      %v839 = vsub.s32 1, %v838
      %v840 = vrot.slane %v831, %v839
      %v843 = vmul.f32 %v829, %v836
      %v844 = vmul.f32 %v828, %v840
      %845 = vset.pattern.permute.xlu0 10
      %846 = vperm.xlu0 %845, %v513
      %v847 = vpop.permute.xlu0 %846
      %v849 = vmul.f32 %v843, %v847
      %v850 = vmul.f32 %v844, %v847
      %v851 = vadd.f32 %v821, %v849
      %v852 = vadd.f32 %v822, %v850
      %853 = vrot.lane.b32.xlu0 %v511, 1
      %v854 = vpop.permute.xlu0 %853
      %855 = vrot.lane.b32.xlu0 %v512, 1
      %v856 = vpop.permute.xlu0 %855
      %vm857 = vcmp.lt.s32.totalorder %v526, 1
      %v858 = vsel %vm857, %v854, %v856
      %v859 = vsel %vm857, %v856, %v854
      %s860 = scalar_lea.vmem %s1, 19
      %v861 = vld [vmem:[%s860] ss:$8 sm:$0x3]
      %v863 = vlaneseq
      %v864 = vshrl.u32 %v863, 7
      %v865 = vsub.s32 0, %v864
      %v866 = vrot.slane %v861, %v865
      %v867 = vlaneseq
      %v868 = vshrl.u32 %v867, 7
      %v869 = vsub.s32 1, %v868
      %v870 = vrot.slane %v861, %v869
      %v873 = vmul.f32 %v859, %v866
      %v874 = vmul.f32 %v858, %v870
      %875 = vset.pattern.permute.xlu0 11
      %876 = vperm.xlu0 %875, %v513
      %v877 = vpop.permute.xlu0 %876
      %v879 = vmul.f32 %v873, %v877
      %v880 = vmul.f32 %v874, %v877
      %v881 = vadd.f32 %v851, %v879
      %v882 = vadd.f32 %v852, %v880
      %s883 = scalar_lea.vmem %s1, 20
      %v884 = vld [vmem:[%s883] ss:$8 sm:$0x3]
      %v886 = vlaneseq
      %v887 = vshrl.u32 %v886, 7
      %v888 = vsub.s32 0, %v887
      %v889 = vrot.slane %v884, %v888
      %v890 = vlaneseq
      %v891 = vshrl.u32 %v890, 7
      %v892 = vsub.s32 1, %v891
      %v893 = vrot.slane %v884, %v892
      %v896 = vmul.f32 %v511, %v889
      %v897 = vmul.f32 %v512, %v893
      %898 = vset.pattern.permute.xlu0 12
      %899 = vperm.xlu0 %898, %v513
      %v900 = vpop.permute.xlu0 %899
      %v902 = vmul.f32 %v896, %v900
      %v903 = vmul.f32 %v897, %v900
      %v904 = vadd.f32 %v881, %v902
      %v905 = vadd.f32 %v882, %v903
      %906 = vrot.lane.b32.xlu0 %v511, 127
      %v907 = vpop.permute.xlu0 %906
      %908 = vrot.lane.b32.xlu0 %v512, 127
      %v909 = vpop.permute.xlu0 %908
      %vm910 = vcmp.lt.s32.totalorder %v526, 127
      %v911 = vsel %vm910, %v907, %v909
      %v912 = vsel %vm910, %v909, %v907
      %s913 = scalar_lea.vmem %s1, 21
      %v914 = vld [vmem:[%s913] ss:$8 sm:$0x3]
      %v916 = vlaneseq
      %v917 = vshrl.u32 %v916, 7
      %v918 = vsub.s32 0, %v917
      %v919 = vrot.slane %v914, %v918
      %v920 = vlaneseq
      %v921 = vshrl.u32 %v920, 7
      %v922 = vsub.s32 1, %v921
      %v923 = vrot.slane %v914, %v922
      %v926 = vmul.f32 %v911, %v919
      %v927 = vmul.f32 %v912, %v923
      %928 = vset.pattern.permute.xlu0 13
      %929 = vperm.xlu0 %928, %v513
      %v930 = vpop.permute.xlu0 %929
      %v932 = vmul.f32 %v926, %v930
      %v933 = vmul.f32 %v927, %v930
      %v934 = vadd.f32 %v904, %v932
      %v935 = vadd.f32 %v905, %v933
      %936 = vrot.lane.b32.xlu0 %v511, 126
      %v937 = vpop.permute.xlu0 %936
      %938 = vrot.lane.b32.xlu0 %v512, 126
      %v939 = vpop.permute.xlu0 %938
      %vm940 = vcmp.lt.s32.totalorder %v526, 126
      %v941 = vsel %vm940, %v937, %v939
      %v942 = vsel %vm940, %v939, %v937
      %s943 = scalar_lea.vmem %s1, 22
      %v944 = vld [vmem:[%s943] ss:$8 sm:$0x3]
      %v946 = vlaneseq
      %v947 = vshrl.u32 %v946, 7
      %v948 = vsub.s32 0, %v947
      %v949 = vrot.slane %v944, %v948
      %v950 = vlaneseq
      %v951 = vshrl.u32 %v950, 7
      %v952 = vsub.s32 1, %v951
      %v953 = vrot.slane %v944, %v952
      %v956 = vmul.f32 %v941, %v949
      %v957 = vmul.f32 %v942, %v953
      %958 = vset.pattern.permute.xlu0 14
      %959 = vperm.xlu0 %958, %v513
      %v960 = vpop.permute.xlu0 %959
      %v962 = vmul.f32 %v956, %v960
      %v963 = vmul.f32 %v957, %v960
      %v964 = vadd.f32 %v934, %v962
      %v965 = vadd.f32 %v935, %v963
      %966 = vrot.lane.b32.xlu0 %v511, 114
      %v967 = vpop.permute.xlu0 %966
      %968 = vrot.lane.b32.xlu0 %v512, 114
      %v969 = vpop.permute.xlu0 %968
      %vm970 = vcmp.lt.s32.totalorder %v526, 114
      %v971 = vsel %vm970, %v967, %v969
      %v972 = vsel %vm970, %v969, %v967
      %s973 = scalar_lea.vmem %s1, 23
      %v974 = vld [vmem:[%s973] ss:$8 sm:$0x3]
      %v976 = vlaneseq
      %v977 = vshrl.u32 %v976, 7
      %v978 = vsub.s32 0, %v977
      %v979 = vrot.slane %v974, %v978
      %v980 = vlaneseq
      %v981 = vshrl.u32 %v980, 7
      %v982 = vsub.s32 1, %v981
      %v983 = vrot.slane %v974, %v982
      %v986 = vmul.f32 %v971, %v979
      %v987 = vmul.f32 %v972, %v983
      %988 = vset.pattern.permute.xlu0 15
      %989 = vperm.xlu0 %988, %v513
      %v990 = vpop.permute.xlu0 %989
      %v992 = vmul.f32 %v986, %v990
      %v993 = vmul.f32 %v987, %v990
      %v994 = vadd.f32 %v964, %v992
      %v995 = vadd.f32 %v965, %v993
      %996 = vrot.lane.b32.xlu0 %v511, 113
      %v997 = vpop.permute.xlu0 %996
      %998 = vrot.lane.b32.xlu0 %v512, 113
      %v999 = vpop.permute.xlu0 %998
      %vm1000 = vcmp.lt.s32.totalorder %v526, 113
      %v1001 = vsel %vm1000, %v997, %v999
      %v1002 = vsel %vm1000, %v999, %v997
      %s1003 = scalar_lea.vmem %s1, 32
      %v1004 = vld [vmem:[%s1003] ss:$8 sm:$0x3]
      %v1006 = vlaneseq
      %v1007 = vshrl.u32 %v1006, 7
      %v1008 = vsub.s32 0, %v1007
      %v1009 = vrot.slane %v1004, %v1008
      %v1010 = vlaneseq
      %v1011 = vshrl.u32 %v1010, 7
      %v1012 = vsub.s32 1, %v1011
      %v1013 = vrot.slane %v1004, %v1012
      %v1016 = vmul.f32 %v1001, %v1009
      %v1017 = vmul.f32 %v1002, %v1013
      %1018 = vset.pattern.permute.xlu0 16
      %1019 = vperm.xlu0 %1018, %v513
      %v1020 = vpop.permute.xlu0 %1019
      %v1022 = vmul.f32 %v1016, %v1020
      %v1023 = vmul.f32 %v1017, %v1020
      %v1024 = vadd.f32 %v994, %v1022
      %v1025 = vadd.f32 %v995, %v1023
      %1026 = vrot.lane.b32.xlu0 %v511, 112
      %v1027 = vpop.permute.xlu0 %1026
      %1028 = vrot.lane.b32.xlu0 %v512, 112
      %v1029 = vpop.permute.xlu0 %1028
      %vm1030 = vcmp.lt.s32.totalorder %v526, 112
      %v1031 = vsel %vm1030, %v1027, %v1029
      %v1032 = vsel %vm1030, %v1029, %v1027
      %s1033 = scalar_lea.vmem %s1, 33
      %v1034 = vld [vmem:[%s1033] ss:$8 sm:$0x3]
      %v1036 = vlaneseq
      %v1037 = vshrl.u32 %v1036, 7
      %v1038 = vsub.s32 0, %v1037
      %v1039 = vrot.slane %v1034, %v1038
      %v1040 = vlaneseq
      %v1041 = vshrl.u32 %v1040, 7
      %v1042 = vsub.s32 1, %v1041
      %v1043 = vrot.slane %v1034, %v1042
      %v1046 = vmul.f32 %v1031, %v1039
      %v1047 = vmul.f32 %v1032, %v1043
      %1048 = vset.pattern.permute.xlu0 17
      %1049 = vperm.xlu0 %1048, %v513
      %v1050 = vpop.permute.xlu0 %1049
      %v1052 = vmul.f32 %v1046, %v1050
      %v1053 = vmul.f32 %v1047, %v1050
      %v1054 = vadd.f32 %v1024, %v1052
      %v1055 = vadd.f32 %v1025, %v1053
      %1056 = vrot.lane.b32.xlu0 %v511, 111
      %v1057 = vpop.permute.xlu0 %1056
      %1058 = vrot.lane.b32.xlu0 %v512, 111
      %v1059 = vpop.permute.xlu0 %1058
      %vm1060 = vcmp.lt.s32.totalorder %v526, 111
      %v1061 = vsel %vm1060, %v1057, %v1059
      %v1062 = vsel %vm1060, %v1059, %v1057
      %s1063 = scalar_lea.vmem %s1, 34
      %v1064 = vld [vmem:[%s1063] ss:$8 sm:$0x3]
      %v1066 = vlaneseq
      %v1067 = vshrl.u32 %v1066, 7
      %v1068 = vsub.s32 0, %v1067
      %v1069 = vrot.slane %v1064, %v1068
      %v1070 = vlaneseq
      %v1071 = vshrl.u32 %v1070, 7
      %v1072 = vsub.s32 1, %v1071
      %v1073 = vrot.slane %v1064, %v1072
      %v1076 = vmul.f32 %v1061, %v1069
      %v1077 = vmul.f32 %v1062, %v1073
      %1078 = vset.pattern.permute.xlu0 18
      %1079 = vperm.xlu0 %1078, %v513
      %v1080 = vpop.permute.xlu0 %1079
      %v1082 = vmul.f32 %v1076, %v1080
      %v1083 = vmul.f32 %v1077, %v1080
      %v1084 = vadd.f32 %v1054, %v1082
      %v1085 = vadd.f32 %v1055, %v1083
      %1086 = vrot.lane.b32.xlu0 %v511, 110
      %v1087 = vpop.permute.xlu0 %1086
      %1088 = vrot.lane.b32.xlu0 %v512, 110
      %v1089 = vpop.permute.xlu0 %1088
      %vm1090 = vcmp.lt.s32.totalorder %v526, 110
      %v1091 = vsel %vm1090, %v1087, %v1089
      %v1092 = vsel %vm1090, %v1089, %v1087
      %s1093 = scalar_lea.vmem %s1, 35
      %v1094 = vld [vmem:[%s1093] ss:$8 sm:$0x3]
      %v1096 = vlaneseq
      %v1097 = vshrl.u32 %v1096, 7
      %v1098 = vsub.s32 0, %v1097
      %v1099 = vrot.slane %v1094, %v1098
      %v1100 = vlaneseq
      %v1101 = vshrl.u32 %v1100, 7
      %v1102 = vsub.s32 1, %v1101
      %v1103 = vrot.slane %v1094, %v1102
      %v1106 = vmul.f32 %v1091, %v1099
      %v1107 = vmul.f32 %v1092, %v1103
      %1108 = vset.pattern.permute.xlu0 19
      %1109 = vperm.xlu0 %1108, %v513
      %v1110 = vpop.permute.xlu0 %1109
      %v1112 = vmul.f32 %v1106, %v1110
      %v1113 = vmul.f32 %v1107, %v1110
      %v1114 = vadd.f32 %v1084, %v1112
      %v1115 = vadd.f32 %v1085, %v1113
      %1116 = vrot.lane.b32.xlu0 %v511, 98
      %v1117 = vpop.permute.xlu0 %1116
      %1118 = vrot.lane.b32.xlu0 %v512, 98
      %v1119 = vpop.permute.xlu0 %1118
      %vm1120 = vcmp.lt.s32.totalorder %v526, 98
      %v1121 = vsel %vm1120, %v1117, %v1119
      %v1122 = vsel %vm1120, %v1119, %v1117
      %s1123 = scalar_lea.vmem %s1, 36
      %v1124 = vld [vmem:[%s1123] ss:$8 sm:$0x3]
      %v1126 = vlaneseq
      %v1127 = vshrl.u32 %v1126, 7
      %v1128 = vsub.s32 0, %v1127
      %v1129 = vrot.slane %v1124, %v1128
      %v1130 = vlaneseq
      %v1131 = vshrl.u32 %v1130, 7
      %v1132 = vsub.s32 1, %v1131
      %v1133 = vrot.slane %v1124, %v1132
      %v1136 = vmul.f32 %v1121, %v1129
      %v1137 = vmul.f32 %v1122, %v1133
      %1138 = vset.pattern.permute.xlu0 20
      %1139 = vperm.xlu0 %1138, %v513
      %v1140 = vpop.permute.xlu0 %1139
      %v1142 = vmul.f32 %v1136, %v1140
      %v1143 = vmul.f32 %v1137, %v1140
      %v1144 = vadd.f32 %v1114, %v1142
      %v1145 = vadd.f32 %v1115, %v1143
      %1146 = vrot.lane.b32.xlu0 %v511, 97
      %v1147 = vpop.permute.xlu0 %1146
      %1148 = vrot.lane.b32.xlu0 %v512, 97
      %v1149 = vpop.permute.xlu0 %1148
      %vm1150 = vcmp.lt.s32.totalorder %v526, 97
      %v1151 = vsel %vm1150, %v1147, %v1149
      %v1152 = vsel %vm1150, %v1149, %v1147
      %s1153 = scalar_lea.vmem %s1, 37
      %v1154 = vld [vmem:[%s1153] ss:$8 sm:$0x3]
      %v1156 = vlaneseq
      %v1157 = vshrl.u32 %v1156, 7
      %v1158 = vsub.s32 0, %v1157
      %v1159 = vrot.slane %v1154, %v1158
      %v1160 = vlaneseq
      %v1161 = vshrl.u32 %v1160, 7
      %v1162 = vsub.s32 1, %v1161
      %v1163 = vrot.slane %v1154, %v1162
      %v1166 = vmul.f32 %v1151, %v1159
      %v1167 = vmul.f32 %v1152, %v1163
      %1168 = vset.pattern.permute.xlu0 21
      %1169 = vperm.xlu0 %1168, %v513
      %v1170 = vpop.permute.xlu0 %1169
      %v1172 = vmul.f32 %v1166, %v1170
      %v1173 = vmul.f32 %v1167, %v1170
      %v1174 = vadd.f32 %v1144, %v1172
      %v1175 = vadd.f32 %v1145, %v1173
      %1176 = vrot.lane.b32.xlu0 %v511, 96
      %v1177 = vpop.permute.xlu0 %1176
      %1178 = vrot.lane.b32.xlu0 %v512, 96
      %v1179 = vpop.permute.xlu0 %1178
      %vm1180 = vcmp.lt.s32.totalorder %v526, 96
      %v1181 = vsel %vm1180, %v1177, %v1179
      %v1182 = vsel %vm1180, %v1179, %v1177
      %s1183 = scalar_lea.vmem %s1, 38
      %v1184 = vld [vmem:[%s1183] ss:$8 sm:$0x3]
      %v1186 = vlaneseq
      %v1187 = vshrl.u32 %v1186, 7
      %v1188 = vsub.s32 0, %v1187
      %v1189 = vrot.slane %v1184, %v1188
      %v1190 = vlaneseq
      %v1191 = vshrl.u32 %v1190, 7
      %v1192 = vsub.s32 1, %v1191
      %v1193 = vrot.slane %v1184, %v1192
      %v1196 = vmul.f32 %v1181, %v1189
      %v1197 = vmul.f32 %v1182, %v1193
      %1198 = vset.pattern.permute.xlu0 22
      %1199 = vperm.xlu0 %1198, %v513
      %v1200 = vpop.permute.xlu0 %1199
      %v1202 = vmul.f32 %v1196, %v1200
      %v1203 = vmul.f32 %v1197, %v1200
      %v1204 = vadd.f32 %v1174, %v1202
      %v1205 = vadd.f32 %v1175, %v1203
      %1206 = vrot.lane.b32.xlu0 %v511, 95
      %v1207 = vpop.permute.xlu0 %1206
      %1208 = vrot.lane.b32.xlu0 %v512, 95
      %v1209 = vpop.permute.xlu0 %1208
      %vm1210 = vcmp.lt.s32.totalorder %v526, 95
      %v1211 = vsel %vm1210, %v1207, %v1209
      %v1212 = vsel %vm1210, %v1209, %v1207
      %s1213 = scalar_lea.vmem %s1, 39
      %v1214 = vld [vmem:[%s1213] ss:$8 sm:$0x3]
      %v1216 = vlaneseq
      %v1217 = vshrl.u32 %v1216, 7
      %v1218 = vsub.s32 0, %v1217
      %v1219 = vrot.slane %v1214, %v1218
      %v1220 = vlaneseq
      %v1221 = vshrl.u32 %v1220, 7
      %v1222 = vsub.s32 1, %v1221
      %v1223 = vrot.slane %v1214, %v1222
      %v1226 = vmul.f32 %v1211, %v1219
      %v1227 = vmul.f32 %v1212, %v1223
      %1228 = vset.pattern.permute.xlu0 23
      %1229 = vperm.xlu0 %1228, %v513
      %v1230 = vpop.permute.xlu0 %1229
      %v1232 = vmul.f32 %v1226, %v1230
      %v1233 = vmul.f32 %v1227, %v1230
      %v1234 = vadd.f32 %v1204, %v1232
      %v1235 = vadd.f32 %v1205, %v1233
      %1236 = vrot.lane.b32.xlu0 %v511, 94
      %v1237 = vpop.permute.xlu0 %1236
      %1238 = vrot.lane.b32.xlu0 %v512, 94
      %v1239 = vpop.permute.xlu0 %1238
      %vm1240 = vcmp.lt.s32.totalorder %v526, 94
      %v1241 = vsel %vm1240, %v1237, %v1239
      %v1242 = vsel %vm1240, %v1239, %v1237
      %s1243 = scalar_lea.vmem %s1, 48
      %v1244 = vld [vmem:[%s1243] ss:$8 sm:$0x3]
      %v1246 = vlaneseq
      %v1247 = vshrl.u32 %v1246, 7
      %v1248 = vsub.s32 0, %v1247
      %v1249 = vrot.slane %v1244, %v1248
      %v1250 = vlaneseq
      %v1251 = vshrl.u32 %v1250, 7
      %v1252 = vsub.s32 1, %v1251
      %v1253 = vrot.slane %v1244, %v1252
      %v1256 = vmul.f32 %v1241, %v1249
      %v1257 = vmul.f32 %v1242, %v1253
      %1258 = vset.pattern.permute.xlu0 24
      %1259 = vperm.xlu0 %1258, %v513
      %v1260 = vpop.permute.xlu0 %1259
      %v1262 = vmul.f32 %v1256, %v1260
      %v1263 = vmul.f32 %v1257, %v1260
      %v1264 = vadd.f32 %v1234, %v1262
      %v1265 = vadd.f32 %v1235, %v1263
      %v1266 = vxor.u32 %v1264, 2147483648
      %v1267 = vxor.u32 %v1265, 2147483648
      %v1268 = vmul.f32 %v1266, 1.442695
      %v1269 = vpow.pop %v1268
      %v1270 = vmul.f32 %v1267, 1.442695
      %v1271 = vpow.pop %v1270
      %v1272 = vadd.f32 %v1269, 1.0
      %v1273 = vadd.f32 %v1271, 1.0
      %v1274 = vrcp.pop %v1272
      %v1275 = vmul.f32 1.0, %v1274
      %v1276 = vrcp.pop %v1273
      %v1277 = vmul.f32 1.0, %v1276
      %v1278 = vmul.f32 %v1264, %v1275
      %v1279 = vmul.f32 %v1265, %v1277
      %v1280 = vld [vmem:[%s6] sm:$0xf]
      %v1281 = vld [vmem:[%s7] sm:$0xf]
      %1283 = vset.pattern.permute.xlu0 0
      %1284 = vperm.xlu0 %1283, %v1281
      %v1285 = vpop.permute.xlu0 %1284
      %v1287 = vadd.f32 %v1285, 0.0
      %1289 = vset.pattern.permute.xlu0 0
      %1290 = vperm.xlu0 %1289, %v1280
      %v1291 = vpop.permute.xlu0 %1290
      %v1293 = vlaneseq
      %v1294 = vshrl.u32 %v1293, 7
      %v1295 = vsub.s32 0, %v1294
      %v1296 = vrot.slane %v511, %v1295
      %v1297 = vlaneseq
      %v1298 = vshrl.u32 %v1297, 7
      %v1299 = vsub.s32 0, %v1298
      %v1300 = vrot.slane %v512, %v1299
      %v1301 = vmul.f32 %v1291, %v1296
      %v1302 = vmul.f32 %v1291, %v1300
      %v1303 = vadd.f32 %v1287, %v1301
      %v1304 = vadd.f32 %v1287, %v1302
      %1305 = vset.pattern.permute.xlu0 1
      %1306 = vperm.xlu0 %1305, %v1280
      %v1307 = vpop.permute.xlu0 %1306
      %v1309 = vlaneseq
      %v1310 = vshrl.u32 %v1309, 7
      %v1311 = vsub.s32 1, %v1310
      %v1312 = vrot.slane %v511, %v1311
      %v1313 = vlaneseq
      %v1314 = vshrl.u32 %v1313, 7
      %v1315 = vsub.s32 1, %v1314
      %v1316 = vrot.slane %v512, %v1315
      %v1317 = vmul.f32 %v1307, %v1312
      %v1318 = vmul.f32 %v1307, %v1316
      %v1319 = vadd.f32 %v1303, %v1317
      %v1320 = vadd.f32 %v1304, %v1318
      %1321 = vset.pattern.permute.xlu0 2
      %1322 = vperm.xlu0 %1321, %v1280
      %v1323 = vpop.permute.xlu0 %1322
      %v1325 = vlaneseq
      %v1326 = vshrl.u32 %v1325, 7
      %v1327 = vsub.s32 0, %v1326
      %v1328 = vrot.slane %v1278, %v1327
      %v1329 = vlaneseq
      %v1330 = vshrl.u32 %v1329, 7
      %v1331 = vsub.s32 0, %v1330
      %v1332 = vrot.slane %v1279, %v1331
      %v1333 = vmul.f32 %v1323, %v1328
      %v1334 = vmul.f32 %v1323, %v1332
      %v1335 = vadd.f32 %v1319, %v1333
      %v1336 = vadd.f32 %v1320, %v1334
      %1337 = vset.pattern.permute.xlu0 3
      %1338 = vperm.xlu0 %1337, %v1280
      %v1339 = vpop.permute.xlu0 %1338
      %v1341 = vlaneseq
      %v1342 = vshrl.u32 %v1341, 7
      %v1343 = vsub.s32 1, %v1342
      %v1344 = vrot.slane %v1278, %v1343
      %v1345 = vlaneseq
      %v1346 = vshrl.u32 %v1345, 7
      %v1347 = vsub.s32 1, %v1346
      %v1348 = vrot.slane %v1279, %v1347
      %v1349 = vmul.f32 %v1339, %v1344
      %v1350 = vmul.f32 %v1339, %v1348
      %v1351 = vadd.f32 %v1335, %v1349
      %v1352 = vadd.f32 %v1336, %v1350
      %v1353 = vld [vmem:[%s8] sm:$0xf]
      %v1354 = vld [vmem:[%s9] sm:$0xf]
      %1356 = vset.pattern.permute.xlu0 0
      %1357 = vperm.xlu0 %1356, %v1354
      %v1358 = vpop.permute.xlu0 %1357
      %v1360 = vadd.f32 %v1358, 0.0
      %1361 = vrot.lane.b32.xlu0 %v1351, 34
      %v1362 = vpop.permute.xlu0 %1361
      %1363 = vrot.lane.b32.xlu0 %v1352, 34
      %v1364 = vpop.permute.xlu0 %1363
      %v1365 = vsel %vm527, %v1362, %v1364
      %v1366 = vsel %vm527, %v1364, %v1362
      %v1367 = vmul.f32 %v1366, %v535
      %v1368 = vmul.f32 %v1365, %v539
      %1370 = vset.pattern.permute.xlu0 0
      %1371 = vperm.xlu0 %1370, %v1353
      %v1372 = vpop.permute.xlu0 %1371
      %v1374 = vmul.f32 %v1367, %v1372
      %v1375 = vmul.f32 %v1368, %v1372
      %v1376 = vadd.f32 %v1360, %v1374
      %v1377 = vadd.f32 %v1360, %v1375
      %1378 = vrot.lane.b32.xlu0 %v1351, 33
      %v1379 = vpop.permute.xlu0 %1378
      %1380 = vrot.lane.b32.xlu0 %v1352, 33
      %v1381 = vpop.permute.xlu0 %1380
      %v1382 = vsel %vm557, %v1379, %v1381
      %v1383 = vsel %vm557, %v1381, %v1379
      %v1384 = vmul.f32 %v1383, %v566
      %v1385 = vmul.f32 %v1382, %v570
      %1386 = vset.pattern.permute.xlu0 1
      %1387 = vperm.xlu0 %1386, %v1353
      %v1388 = vpop.permute.xlu0 %1387
      %v1390 = vmul.f32 %v1384, %v1388
      %v1391 = vmul.f32 %v1385, %v1388
      %v1392 = vadd.f32 %v1376, %v1390
      %v1393 = vadd.f32 %v1377, %v1391
      %1394 = vrot.lane.b32.xlu0 %v1351, 32
      %v1395 = vpop.permute.xlu0 %1394
      %1396 = vrot.lane.b32.xlu0 %v1352, 32
      %v1397 = vpop.permute.xlu0 %1396
      %v1398 = vsel %vm587, %v1395, %v1397
      %v1399 = vsel %vm587, %v1397, %v1395
      %v1400 = vmul.f32 %v1399, %v596
      %v1401 = vmul.f32 %v1398, %v600
      %1402 = vset.pattern.permute.xlu0 2
      %1403 = vperm.xlu0 %1402, %v1353
      %v1404 = vpop.permute.xlu0 %1403
      %v1406 = vmul.f32 %v1400, %v1404
      %v1407 = vmul.f32 %v1401, %v1404
      %v1408 = vadd.f32 %v1392, %v1406
      %v1409 = vadd.f32 %v1393, %v1407
      %1410 = vrot.lane.b32.xlu0 %v1351, 31
      %v1411 = vpop.permute.xlu0 %1410
      %1412 = vrot.lane.b32.xlu0 %v1352, 31
      %v1413 = vpop.permute.xlu0 %1412
      %v1414 = vsel %vm617, %v1411, %v1413
      %v1415 = vsel %vm617, %v1413, %v1411
      %v1416 = vmul.f32 %v1415, %v626
      %v1417 = vmul.f32 %v1414, %v630
      %1418 = vset.pattern.permute.xlu0 3
      %1419 = vperm.xlu0 %1418, %v1353
      %v1420 = vpop.permute.xlu0 %1419
      %v1422 = vmul.f32 %v1416, %v1420
      %v1423 = vmul.f32 %v1417, %v1420
      %v1424 = vadd.f32 %v1408, %v1422
      %v1425 = vadd.f32 %v1409, %v1423
      %1426 = vrot.lane.b32.xlu0 %v1351, 30
      %v1427 = vpop.permute.xlu0 %1426
      %1428 = vrot.lane.b32.xlu0 %v1352, 30
      %v1429 = vpop.permute.xlu0 %1428
      %v1430 = vsel %vm647, %v1427, %v1429
      %v1431 = vsel %vm647, %v1429, %v1427
      %v1432 = vmul.f32 %v1431, %v656
      %v1433 = vmul.f32 %v1430, %v660
      %1434 = vset.pattern.permute.xlu0 4
      %1435 = vperm.xlu0 %1434, %v1353
      %v1436 = vpop.permute.xlu0 %1435
      %v1438 = vmul.f32 %v1432, %v1436
      %v1439 = vmul.f32 %v1433, %v1436
      %v1440 = vadd.f32 %v1424, %v1438
      %v1441 = vadd.f32 %v1425, %v1439
      %1442 = vrot.lane.b32.xlu0 %v1351, 18
      %v1443 = vpop.permute.xlu0 %1442
      %1444 = vrot.lane.b32.xlu0 %v1352, 18
      %v1445 = vpop.permute.xlu0 %1444
      %v1446 = vsel %vm677, %v1443, %v1445
      %v1447 = vsel %vm677, %v1445, %v1443
      %v1448 = vmul.f32 %v1447, %v686
      %v1449 = vmul.f32 %v1446, %v690
      %1450 = vset.pattern.permute.xlu0 5
      %1451 = vperm.xlu0 %1450, %v1353
      %v1452 = vpop.permute.xlu0 %1451
      %v1454 = vmul.f32 %v1448, %v1452
      %v1455 = vmul.f32 %v1449, %v1452
      %v1456 = vadd.f32 %v1440, %v1454
      %v1457 = vadd.f32 %v1441, %v1455
      %1458 = vrot.lane.b32.xlu0 %v1351, 17
      %v1459 = vpop.permute.xlu0 %1458
      %1460 = vrot.lane.b32.xlu0 %v1352, 17
      %v1461 = vpop.permute.xlu0 %1460
      %v1462 = vsel %vm707, %v1459, %v1461
      %v1463 = vsel %vm707, %v1461, %v1459
      %v1464 = vmul.f32 %v1463, %v716
      %v1465 = vmul.f32 %v1462, %v720
      %1466 = vset.pattern.permute.xlu0 6
      %1467 = vperm.xlu0 %1466, %v1353
      %v1468 = vpop.permute.xlu0 %1467
      %v1470 = vmul.f32 %v1464, %v1468
      %v1471 = vmul.f32 %v1465, %v1468
      %v1472 = vadd.f32 %v1456, %v1470
      %v1473 = vadd.f32 %v1457, %v1471
      %1474 = vrot.lane.b32.xlu0 %v1351, 16
      %v1475 = vpop.permute.xlu0 %1474
      %1476 = vrot.lane.b32.xlu0 %v1352, 16
      %v1477 = vpop.permute.xlu0 %1476
      %v1478 = vsel %vm737, %v1475, %v1477
      %v1479 = vsel %vm737, %v1477, %v1475
      %v1480 = vmul.f32 %v1479, %v746
      %v1481 = vmul.f32 %v1478, %v750
      %1482 = vset.pattern.permute.xlu0 7
      %1483 = vperm.xlu0 %1482, %v1353
      %v1484 = vpop.permute.xlu0 %1483
      %v1486 = vmul.f32 %v1480, %v1484
      %v1487 = vmul.f32 %v1481, %v1484
      %v1488 = vadd.f32 %v1472, %v1486
      %v1489 = vadd.f32 %v1473, %v1487
      %1490 = vrot.lane.b32.xlu0 %v1351, 15
      %v1491 = vpop.permute.xlu0 %1490
      %1492 = vrot.lane.b32.xlu0 %v1352, 15
      %v1493 = vpop.permute.xlu0 %1492
      %v1494 = vsel %vm767, %v1491, %v1493
      %v1495 = vsel %vm767, %v1493, %v1491
      %v1496 = vmul.f32 %v1495, %v776
      %v1497 = vmul.f32 %v1494, %v780
      %1498 = vset.pattern.permute.xlu0 8
      %1499 = vperm.xlu0 %1498, %v1353
      %v1500 = vpop.permute.xlu0 %1499
      %v1502 = vmul.f32 %v1496, %v1500
      %v1503 = vmul.f32 %v1497, %v1500
      %v1504 = vadd.f32 %v1488, %v1502
      %v1505 = vadd.f32 %v1489, %v1503
      %1506 = vrot.lane.b32.xlu0 %v1351, 14
      %v1507 = vpop.permute.xlu0 %1506
      %1508 = vrot.lane.b32.xlu0 %v1352, 14
      %v1509 = vpop.permute.xlu0 %1508
      %v1510 = vsel %vm797, %v1507, %v1509
      %v1511 = vsel %vm797, %v1509, %v1507
      %v1512 = vmul.f32 %v1511, %v806
      %v1513 = vmul.f32 %v1510, %v810
      %1514 = vset.pattern.permute.xlu0 9
      %1515 = vperm.xlu0 %1514, %v1353
      %v1516 = vpop.permute.xlu0 %1515
      %v1518 = vmul.f32 %v1512, %v1516
      %v1519 = vmul.f32 %v1513, %v1516
      %v1520 = vadd.f32 %v1504, %v1518
      %v1521 = vadd.f32 %v1505, %v1519
      %1522 = vrot.lane.b32.xlu0 %v1351, 2
      %v1523 = vpop.permute.xlu0 %1522
      %1524 = vrot.lane.b32.xlu0 %v1352, 2
      %v1525 = vpop.permute.xlu0 %1524
      %v1526 = vsel %vm827, %v1523, %v1525
      %v1527 = vsel %vm827, %v1525, %v1523
      %v1528 = vmul.f32 %v1527, %v836
      %v1529 = vmul.f32 %v1526, %v840
      %1530 = vset.pattern.permute.xlu0 10
      %1531 = vperm.xlu0 %1530, %v1353
      %v1532 = vpop.permute.xlu0 %1531
      %v1534 = vmul.f32 %v1528, %v1532
      %v1535 = vmul.f32 %v1529, %v1532
      %v1536 = vadd.f32 %v1520, %v1534
      %v1537 = vadd.f32 %v1521, %v1535
      %1538 = vrot.lane.b32.xlu0 %v1351, 1
      %v1539 = vpop.permute.xlu0 %1538
      %1540 = vrot.lane.b32.xlu0 %v1352, 1
      %v1541 = vpop.permute.xlu0 %1540
      %v1542 = vsel %vm857, %v1539, %v1541
      %v1543 = vsel %vm857, %v1541, %v1539
      %v1544 = vmul.f32 %v1543, %v866
      %v1545 = vmul.f32 %v1542, %v870
      %1546 = vset.pattern.permute.xlu0 11
      %1547 = vperm.xlu0 %1546, %v1353
      %v1548 = vpop.permute.xlu0 %1547
      %v1550 = vmul.f32 %v1544, %v1548
      %v1551 = vmul.f32 %v1545, %v1548
      %v1552 = vadd.f32 %v1536, %v1550
      %v1553 = vadd.f32 %v1537, %v1551
      %v1554 = vmul.f32 %v1351, %v889
      %v1555 = vmul.f32 %v1352, %v893
      %1556 = vset.pattern.permute.xlu0 12
      %1557 = vperm.xlu0 %1556, %v1353
      %v1558 = vpop.permute.xlu0 %1557
      %v1560 = vmul.f32 %v1554, %v1558
      %v1561 = vmul.f32 %v1555, %v1558
      %v1562 = vadd.f32 %v1552, %v1560
      %v1563 = vadd.f32 %v1553, %v1561
      %1564 = vrot.lane.b32.xlu0 %v1351, 127
      %v1565 = vpop.permute.xlu0 %1564
      %1566 = vrot.lane.b32.xlu0 %v1352, 127
      %v1567 = vpop.permute.xlu0 %1566
      %v1568 = vsel %vm910, %v1565, %v1567
      %v1569 = vsel %vm910, %v1567, %v1565
      %v1570 = vmul.f32 %v1568, %v919
      %v1571 = vmul.f32 %v1569, %v923
      %1572 = vset.pattern.permute.xlu0 13
      %1573 = vperm.xlu0 %1572, %v1353
      %v1574 = vpop.permute.xlu0 %1573
      %v1576 = vmul.f32 %v1570, %v1574
      %v1577 = vmul.f32 %v1571, %v1574
      %v1578 = vadd.f32 %v1562, %v1576
      %v1579 = vadd.f32 %v1563, %v1577
      %1580 = vrot.lane.b32.xlu0 %v1351, 126
      %v1581 = vpop.permute.xlu0 %1580
      %1582 = vrot.lane.b32.xlu0 %v1352, 126
      %v1583 = vpop.permute.xlu0 %1582
      %v1584 = vsel %vm940, %v1581, %v1583
      %v1585 = vsel %vm940, %v1583, %v1581
      %v1586 = vmul.f32 %v1584, %v949
      %v1587 = vmul.f32 %v1585, %v953
      %1588 = vset.pattern.permute.xlu0 14
      %1589 = vperm.xlu0 %1588, %v1353
      %v1590 = vpop.permute.xlu0 %1589
      %v1592 = vmul.f32 %v1586, %v1590
      %v1593 = vmul.f32 %v1587, %v1590
      %v1594 = vadd.f32 %v1578, %v1592
      %v1595 = vadd.f32 %v1579, %v1593
      %1596 = vrot.lane.b32.xlu0 %v1351, 114
      %v1597 = vpop.permute.xlu0 %1596
      %1598 = vrot.lane.b32.xlu0 %v1352, 114
      %v1599 = vpop.permute.xlu0 %1598
      %v1600 = vsel %vm970, %v1597, %v1599
      %v1601 = vsel %vm970, %v1599, %v1597
      %v1602 = vmul.f32 %v1600, %v979
      %v1603 = vmul.f32 %v1601, %v983
      %1604 = vset.pattern.permute.xlu0 15
      %1605 = vperm.xlu0 %1604, %v1353
      %v1606 = vpop.permute.xlu0 %1605
      %v1608 = vmul.f32 %v1602, %v1606
      %v1609 = vmul.f32 %v1603, %v1606
      %v1610 = vadd.f32 %v1594, %v1608
      %v1611 = vadd.f32 %v1595, %v1609
      %1612 = vrot.lane.b32.xlu0 %v1351, 113
      %v1613 = vpop.permute.xlu0 %1612
      %1614 = vrot.lane.b32.xlu0 %v1352, 113
      %v1615 = vpop.permute.xlu0 %1614
      %v1616 = vsel %vm1000, %v1613, %v1615
      %v1617 = vsel %vm1000, %v1615, %v1613
      %v1618 = vmul.f32 %v1616, %v1009
      %v1619 = vmul.f32 %v1617, %v1013
      %1620 = vset.pattern.permute.xlu0 16
      %1621 = vperm.xlu0 %1620, %v1353
      %v1622 = vpop.permute.xlu0 %1621
      %v1624 = vmul.f32 %v1618, %v1622
      %v1625 = vmul.f32 %v1619, %v1622
      %v1626 = vadd.f32 %v1610, %v1624
      %v1627 = vadd.f32 %v1611, %v1625
      %1628 = vrot.lane.b32.xlu0 %v1351, 112
      %v1629 = vpop.permute.xlu0 %1628
      %1630 = vrot.lane.b32.xlu0 %v1352, 112
      %v1631 = vpop.permute.xlu0 %1630
      %v1632 = vsel %vm1030, %v1629, %v1631
      %v1633 = vsel %vm1030, %v1631, %v1629
      %v1634 = vmul.f32 %v1632, %v1039
      %v1635 = vmul.f32 %v1633, %v1043
      %1636 = vset.pattern.permute.xlu0 17
      %1637 = vperm.xlu0 %1636, %v1353
      %v1638 = vpop.permute.xlu0 %1637
      %v1640 = vmul.f32 %v1634, %v1638
      %v1641 = vmul.f32 %v1635, %v1638
      %v1642 = vadd.f32 %v1626, %v1640
      %v1643 = vadd.f32 %v1627, %v1641
      %1644 = vrot.lane.b32.xlu0 %v1351, 111
      %v1645 = vpop.permute.xlu0 %1644
      %1646 = vrot.lane.b32.xlu0 %v1352, 111
      %v1647 = vpop.permute.xlu0 %1646
      %v1648 = vsel %vm1060, %v1645, %v1647
      %v1649 = vsel %vm1060, %v1647, %v1645
      %v1650 = vmul.f32 %v1648, %v1069
      %v1651 = vmul.f32 %v1649, %v1073
      %1652 = vset.pattern.permute.xlu0 18
      %1653 = vperm.xlu0 %1652, %v1353
      %v1654 = vpop.permute.xlu0 %1653
      %v1656 = vmul.f32 %v1650, %v1654
      %v1657 = vmul.f32 %v1651, %v1654
      %v1658 = vadd.f32 %v1642, %v1656
      %v1659 = vadd.f32 %v1643, %v1657
      %1660 = vrot.lane.b32.xlu0 %v1351, 110
      %v1661 = vpop.permute.xlu0 %1660
      %1662 = vrot.lane.b32.xlu0 %v1352, 110
      %v1663 = vpop.permute.xlu0 %1662
      %v1664 = vsel %vm1090, %v1661, %v1663
      %v1665 = vsel %vm1090, %v1663, %v1661
      %v1666 = vmul.f32 %v1664, %v1099
      %v1667 = vmul.f32 %v1665, %v1103
      %1668 = vset.pattern.permute.xlu0 19
      %1669 = vperm.xlu0 %1668, %v1353
      %v1670 = vpop.permute.xlu0 %1669
      %v1672 = vmul.f32 %v1666, %v1670
      %v1673 = vmul.f32 %v1667, %v1670
      %v1674 = vadd.f32 %v1658, %v1672
      %v1675 = vadd.f32 %v1659, %v1673
      %1676 = vrot.lane.b32.xlu0 %v1351, 98
      %v1677 = vpop.permute.xlu0 %1676
      %1678 = vrot.lane.b32.xlu0 %v1352, 98
      %v1679 = vpop.permute.xlu0 %1678
      %v1680 = vsel %vm1120, %v1677, %v1679
      %v1681 = vsel %vm1120, %v1679, %v1677
      %v1682 = vmul.f32 %v1680, %v1129
      %v1683 = vmul.f32 %v1681, %v1133
      %1684 = vset.pattern.permute.xlu0 20
      %1685 = vperm.xlu0 %1684, %v1353
      %v1686 = vpop.permute.xlu0 %1685
      %v1688 = vmul.f32 %v1682, %v1686
      %v1689 = vmul.f32 %v1683, %v1686
      %v1690 = vadd.f32 %v1674, %v1688
      %v1691 = vadd.f32 %v1675, %v1689
      %1692 = vrot.lane.b32.xlu0 %v1351, 97
      %v1693 = vpop.permute.xlu0 %1692
      %1694 = vrot.lane.b32.xlu0 %v1352, 97
      %v1695 = vpop.permute.xlu0 %1694
      %v1696 = vsel %vm1150, %v1693, %v1695
      %v1697 = vsel %vm1150, %v1695, %v1693
      %v1698 = vmul.f32 %v1696, %v1159
      %v1699 = vmul.f32 %v1697, %v1163
      %1700 = vset.pattern.permute.xlu0 21
      %1701 = vperm.xlu0 %1700, %v1353
      %v1702 = vpop.permute.xlu0 %1701
      %v1704 = vmul.f32 %v1698, %v1702
      %v1705 = vmul.f32 %v1699, %v1702
      %v1706 = vadd.f32 %v1690, %v1704
      %v1707 = vadd.f32 %v1691, %v1705
      %1708 = vrot.lane.b32.xlu0 %v1351, 96
      %v1709 = vpop.permute.xlu0 %1708
      %1710 = vrot.lane.b32.xlu0 %v1352, 96
      %v1711 = vpop.permute.xlu0 %1710
      %v1712 = vsel %vm1180, %v1709, %v1711
      %v1713 = vsel %vm1180, %v1711, %v1709
      %v1714 = vmul.f32 %v1712, %v1189
      %v1715 = vmul.f32 %v1713, %v1193
      %1716 = vset.pattern.permute.xlu0 22
      %1717 = vperm.xlu0 %1716, %v1353
      %v1718 = vpop.permute.xlu0 %1717
      %v1720 = vmul.f32 %v1714, %v1718
      %v1721 = vmul.f32 %v1715, %v1718
      %v1722 = vadd.f32 %v1706, %v1720
      %v1723 = vadd.f32 %v1707, %v1721
      %1724 = vrot.lane.b32.xlu0 %v1351, 95
      %v1725 = vpop.permute.xlu0 %1724
      %1726 = vrot.lane.b32.xlu0 %v1352, 95
      %v1727 = vpop.permute.xlu0 %1726
      %v1728 = vsel %vm1210, %v1725, %v1727
      %v1729 = vsel %vm1210, %v1727, %v1725
      %v1730 = vmul.f32 %v1728, %v1219
      %v1731 = vmul.f32 %v1729, %v1223
      %1732 = vset.pattern.permute.xlu0 23
      %1733 = vperm.xlu0 %1732, %v1353
      %v1734 = vpop.permute.xlu0 %1733
      %v1736 = vmul.f32 %v1730, %v1734
      %v1737 = vmul.f32 %v1731, %v1734
      %v1738 = vadd.f32 %v1722, %v1736
      %v1739 = vadd.f32 %v1723, %v1737
      %1740 = vrot.lane.b32.xlu0 %v1351, 94
      %v1741 = vpop.permute.xlu0 %1740
      %1742 = vrot.lane.b32.xlu0 %v1352, 94
      %v1743 = vpop.permute.xlu0 %1742
      %v1744 = vsel %vm1240, %v1741, %v1743
      %v1745 = vsel %vm1240, %v1743, %v1741
      %v1746 = vmul.f32 %v1744, %v1249
      %v1747 = vmul.f32 %v1745, %v1253
      %1748 = vset.pattern.permute.xlu0 24
      %1749 = vperm.xlu0 %1748, %v1353
      %v1750 = vpop.permute.xlu0 %1749
      %v1752 = vmul.f32 %v1746, %v1750
      %v1753 = vmul.f32 %v1747, %v1750
      %v1754 = vadd.f32 %v1738, %v1752
      %v1755 = vadd.f32 %v1739, %v1753
      %v1756 = vadd.f32 %v1351, %v360
      %v1757 = vadd.f32 %v1352, %v361
      %1758 = vst [vmem:[%s359] sm:$0xf] %v1756
      %1759 = vst [vmem:[%s359 + $0x8] sm:$0xf] %v1757
      %v1762 = vrot.slane %v360, 4
      %v1763 = vrot.slane %v361, 4
      %v1766 = vadd.f32 %v1754, %v1762
      %v1767 = vadd.f32 %v1755, %v1763
      %v1770 = vrot.slane %v1766, 4
      %v1771 = vrot.slane %v1767, 4
      %1774 = vst [vmem:[%s359] sm:$0xf0] %v1770
      %1775 = vst [vmem:[%s359 + $0x8] sm:$0xf0] %v1771
      %p1776 = scmp.lt.s32.totalorder %s21, 1
      %s1777 = scalar_select %p1776, %s21, 1
      %s1778 = smul.addr %s1777, 2
      %s1779 = smul.addr %s1778, 8
      %s1780 = scalar_lea.vmem %s10, %s1779
      // Predicated region
      $region61: #{ghost_bottleneck_forward.1} parent=59 // pred_check
        %p1781 = pneg %p254
      $region62: #{ghost_bottleneck_forward.1} parent=59 // pred_check_branch
        %1783 = sbr.rel (%p1781) target = $region64
      $region63: #{ghost_bottleneck_forward.1} parent=59 // pred_region
        _
      $region64: #{ghost_bottleneck_forward.1} parent=59 // pred_fallthru
        _
    $region60: #{ghost_bottleneck_forward.1} parent=5 // pred_fallthru
      _
    %p1784 = scmp.le.s32.totalorder 2, %s16
    // Predicated region
    $region65: #{ghost_bottleneck_forward.1} parent=5 // pred_check
      %p1785 = pneg %p1784
    $region66: #{ghost_bottleneck_forward.1} parent=5 // pred_check_branch
      %1787 = sbr.rel (%p1785) target = $region68
    $region67: #{ghost_bottleneck_forward.1} parent=5 // pred_region
      %s1788 = ssub.s32 %s16, 2
      // Predicated region
      $region69: #{ghost_bottleneck_forward.1} parent=67 // pred_check
        %p1789 = pneg %p260
      $region70: #{ghost_bottleneck_forward.1} parent=67 // pred_check_branch
        %1791 = sbr.rel (%p1789) target = $region72
      $region71: #{ghost_bottleneck_forward.1} parent=67 // pred_region
        %p1792 = scmp.lt.s32.totalorder %s22, 1
        %s1793 = scalar_select %p1792, %s22, 1
        %s1794 = smul.addr %s1793, 2
        %s1795 = smul.addr %s1794, 8
        %s1796 = scalar_lea.vmem %s10, %s1795
      $region72: #{ghost_bottleneck_forward.1} parent=67 // pred_fallthru
        _
    $region68: #{ghost_bottleneck_forward.1} parent=5 // pred_fallthru
      _
  $region6: #{ghost_bottleneck_forward.1} parent=0 // loop_footer
    %s20 = sadd.s32 1, %s16
  $region7: #{ghost_bottleneck_forward.1} parent=0 // loop_footer_branch
    %15 = sbr.rel target = $region3
  $region8: #{ghost_bottleneck_forward.1} parent=0 // loop_exit
    _

</llo_original>
